<compile_context>
chip_gen: v7x
topology: tpu7x:2x2x1
jax: 0.10.0
libtpu: 0.0.40
codegen_flags: <defaults>
</compile_context>

<pallas_src>
import functools
import math

import jax
import jax.numpy as jnp
from jax import lax
from jax.experimental import pallas as pl
from jax.experimental.pallas import tpu as pltpu

LN_EPS = 1e-5


def _round_up(x, m):
    return ((x + m - 1) // m) * m


def _vmem_capacity_bytes():
    try:
        return int(pltpu.get_tpu_info().vmem_capacity_bytes)
    except Exception:
        return 64 << 20  # conservative fallback: v7x per-TensorCore VMEM


def _readout_kernel(d_out_p, x_ref, w1_ref, b1_ref, gamma_ref, beta_ref,
                    wh_ref, bh_ref, noise_ref, out_ref):
    x = x_ref[...]

    # --- net[0]: Linear(input_dim, input_dim): bf16 operands, f32 accumulation ---
    h = jnp.dot(x.astype(w1_ref.dtype), w1_ref[...],
                preferred_element_type=jnp.float32) + b1_ref[...]

    # --- net[1]: GELU (exact erf form, matches torch.nn.GELU default), f32 ---
    h = 0.5 * h * (1.0 + lax.erf(h * (1.0 / math.sqrt(2.0))))
    # TODO(synk): tanh-approx GELU (EUP slot) if exact-erf parity is not required.

    # --- net[2]: Dropout(0.1) -> identity (eval-mode semantics) ---
    # TODO(synk): training-mode dropout (pltpu.prng_seed + stateful_bernoulli) if needed.

    # --- net[3]: LayerNorm(input_dim), two-pass variance (numerically safe) ---
    inv_d = 1.0 / h.shape[-1]
    mu = jnp.sum(h, axis=-1, keepdims=True) * inv_d
    hc = h - mu
    var = jnp.sum(hc * hc, axis=-1, keepdims=True) * inv_d
    hn = hc * lax.rsqrt(var + LN_EPS)
    hn = hn * gamma_ref[...] + beta_ref[...]

    # --- fused variational heads: one MXU pass for [mean | logvar] ---
    heads = jnp.dot(hn.astype(wh_ref.dtype), wh_ref[...],
                    preferred_element_type=jnp.float32) + bh_ref[...]
    mean = heads[:, :d_out_p]
    logvar = heads[:, d_out_p:]

    # --- Normal(mean, exp(logvar).sqrt()).rsample() = mean + sigma * eps ---
    # TODO(synk): in-kernel noise (pltpu.prng_seed + stateful_normal) to drop the
    # HBM noise stream if the caller accepts a kernel-owned RNG stream.
    sigma = jnp.exp(0.5 * logvar)
    out_ref[...] = (mean + sigma * noise_ref[...]).astype(out_ref.dtype)


def prepare_params(params, d_out, *, matmul_dtype=jnp.bfloat16):
    """One-time preprocessing: fuse + zero-pad mean/logvar heads, cast matmul weights.

    Padded logvar columns are exactly zero -> sigma = 1 there; those columns are
    multiplied by zero-padded noise and sliced off, so they never reach the output.
    """
    d_in = params["w1"].shape[0]
    d_out_p = _round_up(max(d_out, 128), 128)  # lane-dense head width

    wh = jnp.zeros((d_in, 2 * d_out_p), jnp.float32)
    wh = wh.at[:, :d_out].set(params["wm"])
    wh = wh.at[:, d_out_p:d_out_p + d_out].set(params["wv"])
    bh = jnp.zeros((1, 2 * d_out_p), jnp.float32)
    bh = bh.at[:, :d_out].set(params["bm"][0])
    bh = bh.at[:, d_out_p:d_out_p + d_out].set(params["bv"][0])

    return {
        "w1": params["w1"].astype(matmul_dtype),
        "b1": params["b1"].astype(jnp.float32),
        "gamma": params["gamma"].astype(jnp.float32),
        "beta": params["beta"].astype(jnp.float32),
        "wh": wh.astype(matmul_dtype),
        "bh": bh,
        "d_out": int(d_out),
        "d_out_p": int(d_out_p),
    }


def readout_forward(x, kparams, noise, *, tm=None):
    """x: [N, D_in] float32, noise: [N, D_out] float32 (standard-normal).

    kparams: output of prepare_params().  Returns [N, D_out] float32.
    """
    n, d_in = x.shape
    d_out = kparams["d_out"]
    d_out_p = kparams["d_out_p"]
    w_bytes = jnp.dtype(kparams["w1"].dtype).itemsize

    # --- generation-aware VMEM budgeting ---
    vmem_cap = _vmem_capacity_bytes()
    vmem_ceiling = max(16 << 20, vmem_cap - (8 << 20))
    bytes_weights = ((d_in * d_in + 2 * d_in * d_out_p) * w_bytes
                     + (3 * d_in + 2 * d_out_p) * 4)
    headroom = 6 << 20

    def tile_bytes(t):  # double-buffered streamed tiles: x, noise, out
        return 2 * (t * d_in + 2 * t * d_out_p) * 4

    # Row tile: >= 2 tiles so both v7x TensorCores get work; larger tiles on
    # 128 MiB (v5e/v6e) parts to amortize per-step overhead.
    tm_cap = 1024 if vmem_cap >= (100 << 20) else 512
    if tm is None:
        tm = min(tm_cap, _round_up(max(1, pl.cdiv(n, 2)), 8))
    tm = max(8, _round_up(tm, 8))
    while tm > 8 and bytes_weights + tile_bytes(tm) + headroom > vmem_ceiling:
        tm = max(8, _round_up(tm // 2, 8))
    n_tiles = pl.cdiv(n, tm)

    vmem_limit = int(min(max(bytes_weights + tile_bytes(tm) + headroom, 16 << 20),
                         vmem_ceiling))

    # Column-pad the noise only if needed; rows stay ragged (Pallas masks the edge tile).
    noise_p = noise if d_out_p == d_out else jnp.pad(
        noise, ((0, 0), (0, d_out_p - d_out)))

    cost = pl.CostEstimate(
        flops=2 * n * d_in * (d_in + 2 * d_out_p),
        transcendentals=n * (d_in + d_out_p),
        bytes_accessed=(n * (d_in + 2 * d_out_p) + 3 * d_in + 2 * d_out_p) * 4
                       + (d_in * d_in + 2 * d_in * d_out_p) * w_bytes,
    )

    def build(single_buffer_weights):
        row_spec = lambda cols: pl.BlockSpec((tm, cols), lambda i: (i, 0))
        if single_buffer_weights:
            # Constant index_map -> DMA'd once; Buffered(1) avoids a useless 2x copy.
            res_spec = lambda shape: pl.BlockSpec(
                shape, lambda i: (0, 0), pipeline_mode=pl.Buffered(1))
        else:
            res_spec = lambda shape: pl.BlockSpec(shape, lambda i: (0, 0))
        return pl.pallas_call(
            functools.partial(_readout_kernel, d_out_p),
            out_shape=jax.ShapeDtypeStruct((n, d_out_p), jnp.float32),
            grid=(n_tiles,),
            in_specs=[
                row_spec(d_in),                 # x tile (streamed)
                res_spec((d_in, d_in)),         # w1 (bf16, resident)
                res_spec((1, d_in)),            # b1
                res_spec((1, d_in)),            # ln gamma
                res_spec((1, d_in)),            # ln beta
                res_spec((d_in, 2 * d_out_p)),  # fused [wm|wv] (bf16, padded, resident)
                res_spec((1, 2 * d_out_p)),     # fused [bm|bv] (padded)
                row_spec(d_out_p),              # noise tile (streamed, column-padded)
            ],
            out_specs=row_spec(d_out_p),
            compiler_params=pltpu.CompilerParams(
                dimension_semantics=("parallel",),
                vmem_limit_bytes=vmem_limit,
            ),
            cost_estimate=cost,
        )

    args = (x, kparams["w1"], kparams["b1"], kparams["gamma"], kparams["beta"],
            kparams["wh"], kparams["bh"], noise_p)
    try:
        out_p = build(True)(*args)
    except Exception:
        # Fallback if pipeline_mode=Buffered(1) is rejected by this jax/Mosaic build.
        out_p = build(False)(*args)

    return out_p[:, :d_out]


def init_params(key, d_in, d_out):
    """Deterministic init mimicking torch defaults (kaiming-uniform style bounds)."""
    ks = jax.random.split(key, 6)

    def linear(kw, kb, fan_in, fan_out):
        bound_w = math.sqrt(1.0 / fan_in) * math.sqrt(3.0)  # kaiming_uniform(a=sqrt(5))
        bound_b = 1.0 / math.sqrt(fan_in)
        w = jax.random.uniform(kw, (fan_in, fan_out), jnp.float32, -bound_w, bound_w)
        b = jax.random.uniform(kb, (1, fan_out), jnp.float32, -bound_b, bound_b)
        return w, b

    w1, b1 = linear(ks[0], ks[1], d_in, d_in)
    wm, bm = linear(ks[2], ks[3], d_in, d_out)
    wv, bv = linear(ks[4], ks[5], d_in, d_out)
    return {
        "w1": w1, "b1": b1,
        "gamma": jnp.ones((1, d_in), jnp.float32),
        "beta": jnp.zeros((1, d_in), jnp.float32),
        "wm": wm, "bm": bm,
        "wv": wv, "bv": bv,
    }


def readout_reference(x, params, noise, *, matmul_dtype=jnp.float32):
    """Pure-JAX reference.  matmul_dtype=bf16 mirrors the kernel's MXU operand cast."""
    cast = lambda a: a.astype(matmul_dtype)
    h = jnp.dot(cast(x), cast(params["w1"]),
                preferred_element_type=jnp.float32) + params["b1"]
    h = 0.5 * h * (1.0 + lax.erf(h / math.sqrt(2.0)))
    inv_d = 1.0 / h.shape[-1]
    mu = jnp.sum(h, axis=-1, keepdims=True) * inv_d
    hc = h - mu
    var = jnp.sum(hc * hc, axis=-1, keepdims=True) * inv_d
    hn = hc * lax.rsqrt(var + LN_EPS)
    hn = hn * params["gamma"] + params["beta"]
    mean = jnp.dot(cast(hn), cast(params["wm"]),
                   preferred_element_type=jnp.float32) + params["bm"]
    logvar = jnp.dot(cast(hn), cast(params["wv"]),
                     preferred_element_type=jnp.float32) + params["bv"]
    return mean + jnp.exp(0.5 * logvar) * noise


if __name__ == "__main__":
    key = jax.random.PRNGKey(0)
    k_x, k_p, k_n = jax.random.split(key, 3)

    batch, seq, d_in, d_out = 2, 8, 32, 16
    x = jax.random.normal(k_x, (batch, seq, d_in), jnp.float32)
    params = init_params(k_p, d_in, d_out)
    noise = jax.random.normal(k_n, (batch, seq, d_out), jnp.float32)

    # One-time parameter preprocessing (head fusion / padding / bf16 cast).
    kparams = prepare_params(params, d_out, matmul_dtype=jnp.bfloat16)

    # Flatten leading dims to the kernel's [rows, features] layout.
    x2 = x.reshape(batch * seq, d_in)
    n2 = noise.reshape(batch * seq, d_out)

    out = readout_forward(x2, kparams, n2)
    out = jax.block_until_ready(out).reshape(batch, seq, d_out)

    # Tight check vs a reference that uses the same bf16 MXU-operand casting,
    # looser sanity check vs the pure-f32 reference (bf16 quantization bound).
    ref_bf16 = readout_reference(x2, params, n2,
                                 matmul_dtype=jnp.bfloat16).reshape(batch, seq, d_out)
    ref_f32 = readout_reference(x2, params, n2,
                                matmul_dtype=jnp.float32).reshape(batch, seq, d_out)

    assert out.shape == (batch, seq, d_out)
    assert jnp.allclose(out, ref_bf16, atol=1e-2, rtol=1e-2), \
        "mismatch vs bf16-consistent reference"
    assert jnp.allclose(out, ref_f32, atol=1.5e-1, rtol=1e-1), \
        "mismatch vs f32 reference (beyond bf16 quantization bound)"

    print("KERNEL_OK")
</pallas_src>

<mosaic_0001>
module attributes {stable_mosaic.version = 11 : i64} {
  func.func @_readout_kernel(%arg0: i32, %arg1: memref<8x32xf32, #tpu.memory_space<vmem>>, %arg2: memref<32x32xbf16, #tpu.memory_space<vmem>>, %arg3: memref<1x32xf32, #tpu.memory_space<vmem>>, %arg4: memref<1x32xf32, #tpu.memory_space<vmem>>, %arg5: memref<1x32xf32, #tpu.memory_space<vmem>>, %arg6: memref<32x256xbf16, #tpu.memory_space<vmem>>, %arg7: memref<1x256xf32, #tpu.memory_space<vmem>>, %arg8: memref<8x128xf32, #tpu.memory_space<vmem>>, %arg9: memref<8x128xf32, #tpu.memory_space<vmem>>) attributes {dimension_semantics = [#tpu.dimension_semantics<parallel>], iteration_bounds = array<i64: 2>, scalar_prefetch = 0 : i64, scratch_operands = 0 : i64, tpu.core_type = #tpu.core_type<tc>, window_params = [{transform_indices = @transform_0, window_bounds = array<i64: 8, 32>}, {pipeline_mode = #tpu.pipeline_mode<synchronous>, transform_indices = @transform_1, window_bounds = array<i64: 32, 32>}, {pipeline_mode = #tpu.pipeline_mode<synchronous>, transform_indices = @transform_2, window_bounds = array<i64: 1, 32>}, {pipeline_mode = #tpu.pipeline_mode<synchronous>, transform_indices = @transform_3, window_bounds = array<i64: 1, 32>}, {pipeline_mode = #tpu.pipeline_mode<synchronous>, transform_indices = @transform_4, window_bounds = array<i64: 1, 32>}, {pipeline_mode = #tpu.pipeline_mode<synchronous>, transform_indices = @transform_5, window_bounds = array<i64: 32, 256>}, {pipeline_mode = #tpu.pipeline_mode<synchronous>, transform_indices = @transform_6, window_bounds = array<i64: 1, 256>}, {transform_indices = @transform_7, window_bounds = array<i64: 8, 128>}, {transform_indices = @transform_8, window_bounds = array<i64: 8, 128>}]} {
    %c0 = arith.constant 0 : index
    %c0_0 = arith.constant 0 : index
    %0 = vector.load %arg1[%c0, %c0_0] : memref<8x32xf32, #tpu.memory_space<vmem>>, vector<8x32xf32>
    %1 = arith.truncf %0 : vector<8x32xf32> to vector<8x32xbf16>
    %c0_1 = arith.constant 0 : index
    %c0_2 = arith.constant 0 : index
    %2 = vector.load %arg2[%c0_1, %c0_2] : memref<32x32xbf16, #tpu.memory_space<vmem>>, vector<32x32xbf16>
    %cst = arith.constant dense<0.000000e+00> : vector<8x32xf32>
    %3 = tpu.matmul %1, %2, %cst {dimension_numbers = #tpu.dot_dimension_numbers<[1], [0], [0], [1], [0, 0, 1, 1], [], []>} : vector<8x32xbf16>, vector<32x32xbf16>, vector<8x32xf32> -> vector<8x32xf32>
    %c0_3 = arith.constant 0 : index
    %c0_4 = arith.constant 0 : index
    %4 = vector.load %arg3[%c0_3, %c0_4] : memref<1x32xf32, #tpu.memory_space<vmem>>, vector<1x32xf32>
    %5 = vector.broadcast %4 : vector<1x32xf32> to vector<8x32xf32>
    %6 = arith.addf %3, %5 : vector<8x32xf32>
    %cst_5 = arith.constant 5.000000e-01 : f32
    %7 = vector.broadcast %cst_5 : f32 to vector<8x32xf32>
    %8 = arith.mulf %7, %6 : vector<8x32xf32>
    %cst_6 = arith.constant 0.707106769 : f32
    %9 = vector.broadcast %cst_6 : f32 to vector<8x32xf32>
    %10 = arith.mulf %6, %9 : vector<8x32xf32>
    %11 = math.erf %10 : vector<8x32xf32>
    %cst_7 = arith.constant 1.000000e+00 : f32
    %12 = vector.broadcast %cst_7 : f32 to vector<8x32xf32>
    %13 = arith.addf %12, %11 : vector<8x32xf32>
    %14 = arith.mulf %8, %13 : vector<8x32xf32>
    %cst_8 = arith.constant dense<0.000000e+00> : vector<8xf32>
    %15 = vector.multi_reduction <add>, %14, %cst_8 [1] : vector<8x32xf32> to vector<8xf32>
    %16 = vector.shape_cast %15 : vector<8xf32> to vector<8x1xf32>
    %cst_9 = arith.constant 3.125000e-02 : f32
    %17 = vector.broadcast %cst_9 : f32 to vector<8x1xf32>
    %18 = arith.mulf %16, %17 : vector<8x1xf32>
    %19 = vector.broadcast %18 : vector<8x1xf32> to vector<8x32xf32>
    %20 = arith.subf %14, %19 : vector<8x32xf32>
    %21 = arith.mulf %20, %20 : vector<8x32xf32>
    %cst_10 = arith.constant dense<0.000000e+00> : vector<8xf32>
    %22 = vector.multi_reduction <add>, %21, %cst_10 [1] : vector<8x32xf32> to vector<8xf32>
    %23 = vector.shape_cast %22 : vector<8xf32> to vector<8x1xf32>
    %cst_11 = arith.constant 3.125000e-02 : f32
    %24 = vector.broadcast %cst_11 : f32 to vector<8x1xf32>
    %25 = arith.mulf %23, %24 : vector<8x1xf32>
    %cst_12 = arith.constant 9.99999974E-6 : f32
    %26 = vector.broadcast %cst_12 : f32 to vector<8x1xf32>
    %27 = arith.addf %25, %26 : vector<8x1xf32>
    %28 = math.rsqrt %27 : vector<8x1xf32>
    %29 = vector.broadcast %28 : vector<8x1xf32> to vector<8x32xf32>
    %30 = arith.mulf %20, %29 : vector<8x32xf32>
    %c0_13 = arith.constant 0 : index
    %c0_14 = arith.constant 0 : index
    %31 = vector.load %arg4[%c0_13, %c0_14] : memref<1x32xf32, #tpu.memory_space<vmem>>, vector<1x32xf32>
    %32 = vector.broadcast %31 : vector<1x32xf32> to vector<8x32xf32>
    %33 = arith.mulf %30, %32 : vector<8x32xf32>
    %c0_15 = arith.constant 0 : index
    %c0_16 = arith.constant 0 : index
    %34 = vector.load %arg5[%c0_15, %c0_16] : memref<1x32xf32, #tpu.memory_space<vmem>>, vector<1x32xf32>
    %35 = vector.broadcast %34 : vector<1x32xf32> to vector<8x32xf32>
    %36 = arith.addf %33, %35 : vector<8x32xf32>
    %37 = arith.truncf %36 : vector<8x32xf32> to vector<8x32xbf16>
    %c0_17 = arith.constant 0 : index
    %c0_18 = arith.constant 0 : index
    %38 = vector.load %arg6[%c0_17, %c0_18] : memref<32x256xbf16, #tpu.memory_space<vmem>>, vector<32x256xbf16>
    %cst_19 = arith.constant dense<0.000000e+00> : vector<8x256xf32>
    %39 = tpu.matmul %37, %38, %cst_19 {dimension_numbers = #tpu.dot_dimension_numbers<[1], [0], [0], [1], [0, 0, 1, 1], [], []>} : vector<8x32xbf16>, vector<32x256xbf16>, vector<8x256xf32> -> vector<8x256xf32>
    %c0_20 = arith.constant 0 : index
    %c0_21 = arith.constant 0 : index
    %40 = vector.load %arg7[%c0_20, %c0_21] : memref<1x256xf32, #tpu.memory_space<vmem>>, vector<1x256xf32>
    %41 = vector.broadcast %40 : vector<1x256xf32> to vector<8x256xf32>
    %42 = arith.addf %39, %41 : vector<8x256xf32>
    %43 = vector.extract_strided_slice %42 {offsets = [0, 0], sizes = [8, 128], strides = [1, 1]} : vector<8x256xf32> to vector<8x128xf32>
    %44 = vector.extract_strided_slice %42 {offsets = [0, 128], sizes = [8, 128], strides = [1, 1]} : vector<8x256xf32> to vector<8x128xf32>
    %cst_22 = arith.constant 5.000000e-01 : f32
    %45 = vector.broadcast %cst_22 : f32 to vector<8x128xf32>
    %46 = arith.mulf %45, %44 : vector<8x128xf32>
    %47 = math.exp %46 : vector<8x128xf32>
    %c0_23 = arith.constant 0 : index
    %c0_24 = arith.constant 0 : index
    %48 = vector.load %arg8[%c0_23, %c0_24] : memref<8x128xf32, #tpu.memory_space<vmem>>, vector<8x128xf32>
    %49 = arith.mulf %47, %48 : vector<8x128xf32>
    %50 = arith.addf %43, %49 : vector<8x128xf32>
    %c0_25 = arith.constant 0 : index
    %c0_26 = arith.constant 0 : index
    %51 = vector.load %arg9[%c0_25, %c0_26] : memref<8x128xf32, #tpu.memory_space<vmem>>, vector<8x128xf32>
    tpu.vector_store %arg9[%c0_25, %c0_26], %50 {strides = array<i32>} : memref<8x128xf32, #tpu.memory_space<vmem>>, vector<8x128xf32>,
    return
  }
  func.func @transform_0(%arg0: i32) -> (i32, i32) {
    %c0_i32 = arith.constant 0 : i32
    %c0_i32_0 = arith.constant 0 : i32
    return %arg0, %c0_i32 : i32, i32
  }
  func.func @transform_1(%arg0: i32) -> (i32, i32) {
    %c0_i32 = arith.constant 0 : i32
    %c0_i32_0 = arith.constant 0 : i32
    %c0_i32_1 = arith.constant 0 : i32
    return %c0_i32, %c0_i32_0 : i32, i32
  }
  func.func @transform_2(%arg0: i32) -> (i32, i32) {
    %c0_i32 = arith.constant 0 : i32
    %c0_i32_0 = arith.constant 0 : i32
    %c0_i32_1 = arith.constant 0 : i32
    return %c0_i32, %c0_i32_0 : i32, i32
  }
  func.func @transform_3(%arg0: i32) -> (i32, i32) {
    %c0_i32 = arith.constant 0 : i32
    %c0_i32_0 = arith.constant 0 : i32
    %c0_i32_1 = arith.constant 0 : i32
    return %c0_i32, %c0_i32_0 : i32, i32
  }
  func.func @transform_4(%arg0: i32) -> (i32, i32) {
    %c0_i32 = arith.constant 0 : i32
    %c0_i32_0 = arith.constant 0 : i32
    %c0_i32_1 = arith.constant 0 : i32
    return %c0_i32, %c0_i32_0 : i32, i32
  }
  func.func @transform_5(%arg0: i32) -> (i32, i32) {
    %c0_i32 = arith.constant 0 : i32
    %c0_i32_0 = arith.constant 0 : i32
    %c0_i32_1 = arith.constant 0 : i32
    return %c0_i32, %c0_i32_0 : i32, i32
  }
  func.func @transform_6(%arg0: i32) -> (i32, i32) {
    %c0_i32 = arith.constant 0 : i32
    %c0_i32_0 = arith.constant 0 : i32
    %c0_i32_1 = arith.constant 0 : i32
    return %c0_i32, %c0_i32_0 : i32, i32
  }
  func.func @transform_7(%arg0: i32) -> (i32, i32) {
    %c0_i32 = arith.constant 0 : i32
    %c0_i32_0 = arith.constant 0 : i32
    return %arg0, %c0_i32 : i32, i32
  }
  func.func @transform_8(%arg0: i32) -> (i32, i32) {
    %c0_i32 = arith.constant 0 : i32
    %c0_i32_0 = arith.constant 0 : i32
    return %arg0, %c0_i32 : i32, i32
  }
}

module attributes {stable_mosaic.version = 11 : i64} {
  func.func @_readout_kernel(%arg0: i32, %arg1: memref<8x32xf32, #tpu.memory_space<vmem>>, %arg2: memref<32x32xbf16, #tpu.memory_space<vmem>>, %arg3: memref<1x32xf32, #tpu.memory_space<vmem>>, %arg4: memref<1x32xf32, #tpu.memory_space<vmem>>, %arg5: memref<1x32xf32, #tpu.memory_space<vmem>>, %arg6: memref<32x256xbf16, #tpu.memory_space<vmem>>, %arg7: memref<1x256xf32, #tpu.memory_space<vmem>>, %arg8: memref<8x128xf32, #tpu.memory_space<vmem>>, %arg9: memref<8x128xf32, #tpu.memory_space<vmem>>) attributes {dimension_semantics = [#tpu.dimension_semantics<parallel>], iteration_bounds = array<i64: 2>, scalar_prefetch = 0 : i64, scratch_operands = 0 : i64, tpu.core_type = #tpu.core_type<tc>, window_params = [{transform_indices = @transform_0, window_bounds = array<i64: 8, 32>}, {pipeline_mode = #tpu.pipeline_mode<synchronous>, transform_indices = @transform_1, window_bounds = array<i64: 32, 32>}, {pipeline_mode = #tpu.pipeline_mode<synchronous>, transform_indices = @transform_2, window_bounds = array<i64: 1, 32>}, {pipeline_mode = #tpu.pipeline_mode<synchronous>, transform_indices = @transform_3, window_bounds = array<i64: 1, 32>}, {pipeline_mode = #tpu.pipeline_mode<synchronous>, transform_indices = @transform_4, window_bounds = array<i64: 1, 32>}, {pipeline_mode = #tpu.pipeline_mode<synchronous>, transform_indices = @transform_5, window_bounds = array<i64: 32, 256>}, {pipeline_mode = #tpu.pipeline_mode<synchronous>, transform_indices = @transform_6, window_bounds = array<i64: 1, 256>}, {transform_indices = @transform_7, window_bounds = array<i64: 8, 128>}, {transform_indices = @transform_8, window_bounds = array<i64: 8, 128>}]} {
    %c0 = arith.constant 0 : index
    %c0_0 = arith.constant 0 : index
    %0 = vector.load %arg1[%c0, %c0_0] : memref<8x32xf32, #tpu.memory_space<vmem>>, vector<8x32xf32>
    %1 = arith.truncf %0 : vector<8x32xf32> to vector<8x32xbf16>
    %c0_1 = arith.constant 0 : index
    %c0_2 = arith.constant 0 : index
    %2 = vector.load %arg2[%c0_1, %c0_2] : memref<32x32xbf16, #tpu.memory_space<vmem>>, vector<32x32xbf16>
    %cst = arith.constant dense<0.000000e+00> : vector<8x32xf32>
    %3 = tpu.matmul %1, %2, %cst {dimension_numbers = #tpu.dot_dimension_numbers<[1], [0], [0], [1], [0, 0, 1, 1], [], []>} : vector<8x32xbf16>, vector<32x32xbf16>, vector<8x32xf32> -> vector<8x32xf32>
    %c0_3 = arith.constant 0 : index
    %c0_4 = arith.constant 0 : index
    %4 = vector.load %arg3[%c0_3, %c0_4] : memref<1x32xf32, #tpu.memory_space<vmem>>, vector<1x32xf32>
    %5 = vector.broadcast %4 : vector<1x32xf32> to vector<8x32xf32>
    %6 = arith.addf %3, %5 : vector<8x32xf32>
    %cst_5 = arith.constant 5.000000e-01 : f32
    %7 = vector.broadcast %cst_5 : f32 to vector<8x32xf32>
    %8 = arith.mulf %7, %6 : vector<8x32xf32>
    %cst_6 = arith.constant 0.707106769 : f32
    %9 = vector.broadcast %cst_6 : f32 to vector<8x32xf32>
    %10 = arith.mulf %6, %9 : vector<8x32xf32>
    %11 = math.erf %10 : vector<8x32xf32>
    %cst_7 = arith.constant 1.000000e+00 : f32
    %12 = vector.broadcast %cst_7 : f32 to vector<8x32xf32>
    %13 = arith.addf %12, %11 : vector<8x32xf32>
    %14 = arith.mulf %8, %13 : vector<8x32xf32>
    %cst_8 = arith.constant dense<0.000000e+00> : vector<8xf32>
    %15 = vector.multi_reduction <add>, %14, %cst_8 [1] : vector<8x32xf32> to vector<8xf32>
    %16 = vector.shape_cast %15 : vector<8xf32> to vector<8x1xf32>
    %cst_9 = arith.constant 3.125000e-02 : f32
    %17 = vector.broadcast %cst_9 : f32 to vector<8x1xf32>
    %18 = arith.mulf %16, %17 : vector<8x1xf32>
    %19 = vector.broadcast %18 : vector<8x1xf32> to vector<8x32xf32>
    %20 = arith.subf %14, %19 : vector<8x32xf32>
    %21 = arith.mulf %20, %20 : vector<8x32xf32>
    %cst_10 = arith.constant dense<0.000000e+00> : vector<8xf32>
    %22 = vector.multi_reduction <add>, %21, %cst_10 [1] : vector<8x32xf32> to vector<8xf32>
    %23 = vector.shape_cast %22 : vector<8xf32> to vector<8x1xf32>
    %cst_11 = arith.constant 3.125000e-02 : f32
    %24 = vector.broadcast %cst_11 : f32 to vector<8x1xf32>
    %25 = arith.mulf %23, %24 : vector<8x1xf32>
    %cst_12 = arith.constant 9.99999974E-6 : f32
    %26 = vector.broadcast %cst_12 : f32 to vector<8x1xf32>
    %27 = arith.addf %25, %26 : vector<8x1xf32>
    %28 = math.rsqrt %27 : vector<8x1xf32>
    %29 = vector.broadcast %28 : vector<8x1xf32> to vector<8x32xf32>
    %30 = arith.mulf %20, %29 : vector<8x32xf32>
    %c0_13 = arith.constant 0 : index
    %c0_14 = arith.constant 0 : index
    %31 = vector.load %arg4[%c0_13, %c0_14] : memref<1x32xf32, #tpu.memory_space<vmem>>, vector<1x32xf32>
    %32 = vector.broadcast %31 : vector<1x32xf32> to vector<8x32xf32>
    %33 = arith.mulf %30, %32 : vector<8x32xf32>
    %c0_15 = arith.constant 0 : index
    %c0_16 = arith.constant 0 : index
    %34 = vector.load %arg5[%c0_15, %c0_16] : memref<1x32xf32, #tpu.memory_space<vmem>>, vector<1x32xf32>
    %35 = vector.broadcast %34 : vector<1x32xf32> to vector<8x32xf32>
    %36 = arith.addf %33, %35 : vector<8x32xf32>
    %37 = arith.truncf %36 : vector<8x32xf32> to vector<8x32xbf16>
    %c0_17 = arith.constant 0 : index
    %c0_18 = arith.constant 0 : index
    %38 = vector.load %arg6[%c0_17, %c0_18] : memref<32x256xbf16, #tpu.memory_space<vmem>>, vector<32x256xbf16>
    %cst_19 = arith.constant dense<0.000000e+00> : vector<8x256xf32>
    %39 = tpu.matmul %37, %38, %cst_19 {dimension_numbers = #tpu.dot_dimension_numbers<[1], [0], [0], [1], [0, 0, 1, 1], [], []>} : vector<8x32xbf16>, vector<32x256xbf16>, vector<8x256xf32> -> vector<8x256xf32>
    %c0_20 = arith.constant 0 : index
    %c0_21 = arith.constant 0 : index
    %40 = vector.load %arg7[%c0_20, %c0_21] : memref<1x256xf32, #tpu.memory_space<vmem>>, vector<1x256xf32>
    %41 = vector.broadcast %40 : vector<1x256xf32> to vector<8x256xf32>
    %42 = arith.addf %39, %41 : vector<8x256xf32>
    %43 = vector.extract_strided_slice %42 {offsets = [0, 0], sizes = [8, 128], strides = [1, 1]} : vector<8x256xf32> to vector<8x128xf32>
    %44 = vector.extract_strided_slice %42 {offsets = [0, 128], sizes = [8, 128], strides = [1, 1]} : vector<8x256xf32> to vector<8x128xf32>
    %cst_22 = arith.constant 5.000000e-01 : f32
    %45 = vector.broadcast %cst_22 : f32 to vector<8x128xf32>
    %46 = arith.mulf %45, %44 : vector<8x128xf32>
    %47 = math.exp %46 : vector<8x128xf32>
    %c0_23 = arith.constant 0 : index
    %c0_24 = arith.constant 0 : index
    %48 = vector.load %arg8[%c0_23, %c0_24] : memref<8x128xf32, #tpu.memory_space<vmem>>, vector<8x128xf32>
    %49 = arith.mulf %47, %48 : vector<8x128xf32>
    %50 = arith.addf %43, %49 : vector<8x128xf32>
    %c0_25 = arith.constant 0 : index
    %c0_26 = arith.constant 0 : index
    %51 = vector.load %arg9[%c0_25, %c0_26] : memref<8x128xf32, #tpu.memory_space<vmem>>, vector<8x128xf32>
    tpu.vector_store %arg9[%c0_25, %c0_26], %50 {strides = array<i32>} : memref<8x128xf32, #tpu.memory_space<vmem>>, vector<8x128xf32>,
    return
  }
  func.func @transform_0(%arg0: i32) -> (i32, i32) {
    %c0_i32 = arith.constant 0 : i32
    %c0_i32_0 = arith.constant 0 : i32
    return %arg0, %c0_i32 : i32, i32
  }
  func.func @transform_1(%arg0: i32) -> (i32, i32) {
    %c0_i32 = arith.constant 0 : i32
    %c0_i32_0 = arith.constant 0 : i32
    %c0_i32_1 = arith.constant 0 : i32
    return %c0_i32, %c0_i32_0 : i32, i32
  }
  func.func @transform_2(%arg0: i32) -> (i32, i32) {
    %c0_i32 = arith.constant 0 : i32
    %c0_i32_0 = arith.constant 0 : i32
    %c0_i32_1 = arith.constant 0 : i32
    return %c0_i32, %c0_i32_0 : i32, i32
  }
  func.func @transform_3(%arg0: i32) -> (i32, i32) {
    %c0_i32 = arith.constant 0 : i32
    %c0_i32_0 = arith.constant 0 : i32
    %c0_i32_1 = arith.constant 0 : i32
    return %c0_i32, %c0_i32_0 : i32, i32
  }
  func.func @transform_4(%arg0: i32) -> (i32, i32) {
    %c0_i32 = arith.constant 0 : i32
    %c0_i32_0 = arith.constant 0 : i32
    %c0_i32_1 = arith.constant 0 : i32
    return %c0_i32, %c0_i32_0 : i32, i32
  }
  func.func @transform_5(%arg0: i32) -> (i32, i32) {
    %c0_i32 = arith.constant 0 : i32
    %c0_i32_0 = arith.constant 0 : i32
    %c0_i32_1 = arith.constant 0 : i32
    return %c0_i32, %c0_i32_0 : i32, i32
  }
  func.func @transform_6(%arg0: i32) -> (i32, i32) {
    %c0_i32 = arith.constant 0 : i32
    %c0_i32_0 = arith.constant 0 : i32
    %c0_i32_1 = arith.constant 0 : i32
    return %c0_i32, %c0_i32_0 : i32, i32
  }
  func.func @transform_7(%arg0: i32) -> (i32, i32) {
    %c0_i32 = arith.constant 0 : i32
    %c0_i32_0 = arith.constant 0 : i32
    return %arg0, %c0_i32 : i32, i32
  }
  func.func @transform_8(%arg0: i32) -> (i32, i32) {
    %c0_i32 = arith.constant 0 : i32
    %c0_i32_0 = arith.constant 0 : i32
    return %arg0, %c0_i32 : i32, i32
  }
}

</mosaic_0001>

<llo_original>
// kernel: tpu_custom_call.1
$region0: #{tpu_custom_call.1}
  #allocation0 [shape = 'u32[]', space=smem, size = 0x4, offset = 0x4, fixed_abs, tag = 'smem constant byte address 0x4 - core index']
  #allocation1 [shape = 'u32[144,128]{1,0:T(1,128)}', space=vmem, size = 0x12000, scoped, tag = 'internal scratch']
  %s0 = inlined_call_operand.hbm [shape: f32[16,32], index: 0, kind: input, shape index: {}]
  %s1 = inlined_call_operand.hbm [shape: bf16[32,32], index: 1, kind: input, shape index: {}]
  %s2 = inlined_call_operand.vmem [shape: f32[1,32], index: 2, kind: input, shape index: {}]
  %s3 = inlined_call_operand.vmem [shape: f32[1,32], index: 3, kind: input, shape index: {}]
  %s4 = inlined_call_operand.vmem [shape: f32[1,32], index: 4, kind: input, shape index: {}]
  %s5 = inlined_call_operand.hbm [shape: bf16[32,256], index: 5, kind: input, shape index: {}]
  %s6 = inlined_call_operand.vmem [shape: f32[1,256], index: 6, kind: input, shape index: {}]
  %s7 = inlined_call_operand.vmem [shape: f32[16,128], index: 7, kind: input, shape index: {}]
  %s8 = inlined_call_operand.hbm [shape: f32[16,128], index: 8, kind: output, shape index: {}]
  %s9 = sld [smem:[#allocation0]]
  $region77: #{tpu_custom_call.1} parent=0
    _
  %s11 = ssub.s32 1, %s9
  %s12 = scalar_select 0, %s11, %s9
  $region1: #{tpu_custom_call.1} parent=0
    #allocation2 [shape = 'u8[8192]{0}', space=vmem, size = 0x2000, scoped, tag = 'input window, operand 0']
    #allocation3 [shape = 's32[2]{0}', space=sflag, size = 0x8, scoped, tag = 'scoped memory for tpu_custom_call.1']
    #allocation4 [shape = 's32[2]{0}', space=sflag, size = 0x8, scoped, tag = 'scoped memory for tpu_custom_call.1']
    #allocation5 [shape = 'u8[8192]{0}', space=vmem, size = 0x2000, scoped, tag = 'input window, operand 1, single buffered']
    #allocation6 [shape = 's32[1]{0}', space=sflag, size = 0x4, scoped, tag = 'scoped memory for tpu_custom_call.1']
    #allocation7 [shape = 'u8[16384]{0}', space=vmem, size = 0x4000, scoped, tag = 'input window, operand 5, single buffered']
    #allocation8 [shape = 'u8[8192]{0}', space=vmem, size = 0x2000, scoped, tag = 'output window, operand 0']
    %13 = vsyncpa [#allocation3], 0
    %s14 = scalar_lea.sflag [#allocation3], 1
    %15 = vsyncpa %s14, 0
    %16 = vsyncpa [#allocation6], 0
    %17 = vsyncpa [#allocation4], 0
    %s18 = scalar_lea.sflag [#allocation4], 1
    %19 = vsyncpa %s18, 0
    loop: start=0, step=1, limit=4
    $region2: #{tpu_custom_call.1} parent=1 // loop_pre_header
      _
    $region3: #{tpu_custom_call.1} parent=1 // loop_header
      %s21 = sphi 0, %s25
      %p22 = scmp.ge.s32.totalorder %s21, 4
      %s31 = sphi 0, %s33
      %s34 = sphi 0, %s31
      %s35 = sphi 0, %s34
      %s51 = sphi 0, %s35
      %s55 = sphi 0, %s55
      %s57 = sphi 0, %s55
      %s58 = sphi 0, %s57
      %s72 = sphi 0, %s58
      %s76 = sphi 0, %s76
      %s78 = sphi 0, %s76
      %s79 = sphi 0, %s78
      %s93 = sphi 0, %s79
      %s97 = sphi 0, %s97
      %s99 = sphi 0, %s97
      %s100 = sphi 0, %s99
      %s114 = sphi 0, %s100
      %s118 = sphi 0, %s118
      %s120 = sphi 0, %s118
      %s121 = sphi 0, %s120
      %s135 = sphi 0, %s121
      %s139 = sphi 0, %s139
      %s141 = sphi 0, %s139
      %s142 = sphi 0, %s141
      %s156 = sphi 0, %s142
      %s160 = sphi 0, %s160
      %s162 = sphi 0, %s160
      %s163 = sphi 0, %s162
      %s177 = sphi 0, %s163
      %s183 = sphi 0, %s185
      %s186 = sphi 0, %s183
      %s187 = sphi 0, %s186
      %s203 = sphi 0, %s187
      %s209 = sphi 0, %s211
      %s212 = sphi 0, %s209
      %s213 = sphi 0, %s212
      %s229 = sphi 0, %s213
    $region4: #{tpu_custom_call.1} parent=1 // loop_header_branch
      %24 = sbr.rel (%p22) target = $region8
    $region5: #{tpu_custom_call.1} parent=1 // loop_body
      %s26 = ssub.s32 %s21, 1
      %s27 = ssub.s32 %s21, 2
      %s28 = sadd.s32 %s21, 1
      %s29 = ssub.s32 %s21, %s28
      %p30 = scmp.eq.s32.totalorder %s29, 0
      %s32 = sadd.s32 %s31, 1
      %s33 = scalar_select %p30, %s31, %s32
      %p36 = pneg %p30
      %p37 = scmp.eq.s32.totalorder %s21, 1
      %p38 = por %p36, %p37
      %p39 = scmp.ne.s32.totalorder %s31, %s34
      %p40 = scmp.eq.s32.totalorder %s21, 0
      %p41 = por %p39, %p40
      %p42 = scmp.ne.s32.totalorder %s31, %s34
      %p43 = scmp.eq.s32.totalorder %s26, 1
      %p44 = por %p42, %p43
      %p45 = scmp.ne.s32.totalorder %s34, %s35
      %p46 = scmp.eq.s32.totalorder %s26, 0
      %p47 = por %p45, %p46
      %p48 = scmp.ne.s32.totalorder %s34, %s35
      %p49 = scmp.eq.s32.totalorder %s27, 1
      %p50 = por %p48, %p49
      %p52 = scmp.ne.s32.totalorder %s35, %s51
      %p53 = scmp.eq.s32.totalorder %s27, 0
      %p54 = por %p52, %p53
      %s56 = sadd.s32 %s55, 1
      %p59 = scmp.eq.s32.totalorder %s21, 1
      %p60 = scmp.ne.s32.totalorder %s55, %s57
      %p61 = scmp.eq.s32.totalorder %s21, 0
      %p62 = por %p60, %p61
      %p63 = scmp.ne.s32.totalorder %s55, %s57
      %p64 = scmp.eq.s32.totalorder %s26, 1
      %p65 = por %p63, %p64
      %p66 = scmp.ne.s32.totalorder %s57, %s58
      %p67 = scmp.eq.s32.totalorder %s26, 0
      %p68 = por %p66, %p67
      %p69 = scmp.ne.s32.totalorder %s57, %s58
      %p70 = scmp.eq.s32.totalorder %s27, 1
      %p71 = por %p69, %p70
      %p73 = scmp.ne.s32.totalorder %s58, %s72
      %p74 = scmp.eq.s32.totalorder %s27, 0
      %p75 = por %p73, %p74
      %s77 = sadd.s32 %s76, 1
      %p80 = scmp.eq.s32.totalorder %s21, 1
      %p81 = scmp.ne.s32.totalorder %s76, %s78
      %p82 = scmp.eq.s32.totalorder %s21, 0
      %p83 = por %p81, %p82
      %p84 = scmp.ne.s32.totalorder %s76, %s78
      %p85 = scmp.eq.s32.totalorder %s26, 1
      %p86 = por %p84, %p85
      %p87 = scmp.ne.s32.totalorder %s78, %s79
      %p88 = scmp.eq.s32.totalorder %s26, 0
      %p89 = por %p87, %p88
      %p90 = scmp.ne.s32.totalorder %s78, %s79
      %p91 = scmp.eq.s32.totalorder %s27, 1
      %p92 = por %p90, %p91
      %p94 = scmp.ne.s32.totalorder %s79, %s93
      %p95 = scmp.eq.s32.totalorder %s27, 0
      %p96 = por %p94, %p95
      %s98 = sadd.s32 %s97, 1
      %p101 = scmp.eq.s32.totalorder %s21, 1
      %p102 = scmp.ne.s32.totalorder %s97, %s99
      %p103 = scmp.eq.s32.totalorder %s21, 0
      %p104 = por %p102, %p103
      %p105 = scmp.ne.s32.totalorder %s97, %s99
      %p106 = scmp.eq.s32.totalorder %s26, 1
      %p107 = por %p105, %p106
      %p108 = scmp.ne.s32.totalorder %s99, %s100
      %p109 = scmp.eq.s32.totalorder %s26, 0
      %p110 = por %p108, %p109
      %p111 = scmp.ne.s32.totalorder %s99, %s100
      %p112 = scmp.eq.s32.totalorder %s27, 1
      %p113 = por %p111, %p112
      %p115 = scmp.ne.s32.totalorder %s100, %s114
      %p116 = scmp.eq.s32.totalorder %s27, 0
      %p117 = por %p115, %p116
      %s119 = sadd.s32 %s118, 1
      %p122 = scmp.eq.s32.totalorder %s21, 1
      %p123 = scmp.ne.s32.totalorder %s118, %s120
      %p124 = scmp.eq.s32.totalorder %s21, 0
      %p125 = por %p123, %p124
      %p126 = scmp.ne.s32.totalorder %s118, %s120
      %p127 = scmp.eq.s32.totalorder %s26, 1
      %p128 = por %p126, %p127
      %p129 = scmp.ne.s32.totalorder %s120, %s121
      %p130 = scmp.eq.s32.totalorder %s26, 0
      %p131 = por %p129, %p130
      %p132 = scmp.ne.s32.totalorder %s120, %s121
      %p133 = scmp.eq.s32.totalorder %s27, 1
      %p134 = por %p132, %p133
      %p136 = scmp.ne.s32.totalorder %s121, %s135
      %p137 = scmp.eq.s32.totalorder %s27, 0
      %p138 = por %p136, %p137
      %s140 = sadd.s32 %s139, 1
      %p143 = scmp.eq.s32.totalorder %s21, 1
      %p144 = scmp.ne.s32.totalorder %s139, %s141
      %p145 = scmp.eq.s32.totalorder %s21, 0
      %p146 = por %p144, %p145
      %p147 = scmp.ne.s32.totalorder %s139, %s141
      %p148 = scmp.eq.s32.totalorder %s26, 1
      %p149 = por %p147, %p148
      %p150 = scmp.ne.s32.totalorder %s141, %s142
      %p151 = scmp.eq.s32.totalorder %s26, 0
      %p152 = por %p150, %p151
      %p153 = scmp.ne.s32.totalorder %s141, %s142
      %p154 = scmp.eq.s32.totalorder %s27, 1
      %p155 = por %p153, %p154
      %p157 = scmp.ne.s32.totalorder %s142, %s156
      %p158 = scmp.eq.s32.totalorder %s27, 0
      %p159 = por %p157, %p158
      %s161 = sadd.s32 %s160, 1
      %p164 = scmp.eq.s32.totalorder %s21, 1
      %p165 = scmp.ne.s32.totalorder %s160, %s162
      %p166 = scmp.eq.s32.totalorder %s21, 0
      %p167 = por %p165, %p166
      %p168 = scmp.ne.s32.totalorder %s160, %s162
      %p169 = scmp.eq.s32.totalorder %s26, 1
      %p170 = por %p168, %p169
      %p171 = scmp.ne.s32.totalorder %s162, %s163
      %p172 = scmp.eq.s32.totalorder %s26, 0
      %p173 = por %p171, %p172
      %p174 = scmp.ne.s32.totalorder %s162, %s163
      %p175 = scmp.eq.s32.totalorder %s27, 1
      %p176 = por %p174, %p175
      %p178 = scmp.ne.s32.totalorder %s163, %s177
      %p179 = scmp.eq.s32.totalorder %s27, 0
      %p180 = por %p178, %p179
      %s181 = ssub.s32 %s21, %s28
      %p182 = scmp.eq.s32.totalorder %s181, 0
      %s184 = sadd.s32 %s183, 1
      %s185 = scalar_select %p182, %s183, %s184
      %p188 = pneg %p182
      %p189 = scmp.eq.s32.totalorder %s21, 1
      %p190 = por %p188, %p189
      %p191 = scmp.ne.s32.totalorder %s183, %s186
      %p192 = scmp.eq.s32.totalorder %s21, 0
      %p193 = por %p191, %p192
      %p194 = scmp.ne.s32.totalorder %s183, %s186
      %p195 = scmp.eq.s32.totalorder %s26, 1
      %p196 = por %p194, %p195
      %p197 = scmp.ne.s32.totalorder %s186, %s187
      %p198 = scmp.eq.s32.totalorder %s26, 0
      %p199 = por %p197, %p198
      %p200 = scmp.ne.s32.totalorder %s186, %s187
      %p201 = scmp.eq.s32.totalorder %s27, 1
      %p202 = por %p200, %p201
      %p204 = scmp.ne.s32.totalorder %s187, %s203
      %p205 = scmp.eq.s32.totalorder %s27, 0
      %p206 = por %p204, %p205
      %s207 = ssub.s32 %s21, %s28
      %p208 = scmp.eq.s32.totalorder %s207, 0
      %s210 = sadd.s32 %s209, 1
      %s211 = scalar_select %p208, %s209, %s210
      %p214 = pneg %p208
      %p215 = scmp.eq.s32.totalorder %s21, 1
      %p216 = por %p214, %p215
      %p217 = scmp.ne.s32.totalorder %s209, %s212
      %p218 = scmp.eq.s32.totalorder %s21, 0
      %p219 = por %p217, %p218
      %p220 = scmp.ne.s32.totalorder %s209, %s212
      %p221 = scmp.eq.s32.totalorder %s26, 1
      %p222 = por %p220, %p221
      %p223 = scmp.ne.s32.totalorder %s212, %s213
      %p224 = scmp.eq.s32.totalorder %s26, 0
      %p225 = por %p223, %p224
      %p226 = scmp.ne.s32.totalorder %s212, %s213
      %p227 = scmp.eq.s32.totalorder %s27, 1
      %p228 = por %p226, %p227
      %p230 = scmp.ne.s32.totalorder %s213, %s229
      %p231 = scmp.eq.s32.totalorder %s27, 0
      %p232 = por %p230, %p231
      %p233 = scmp.le.s32.totalorder 1, %s21
      %p234 = scmp.lt.s32.totalorder %s21, 3
      %p235 = pnand %p233, %p234
      %p236 = pneg %p235
      // Predicated region
      $region9: #{tpu_custom_call.1} parent=5 // pred_check
        _
      $region10: #{tpu_custom_call.1} parent=5 // pred_check_branch
        %238 = sbr.rel (%p235) target = $region12
      $region11: #{tpu_custom_call.1} parent=5 // pred_region
        %s239 = ssub.s32 %s21, 1
        // Predicated region
        $region13: #{tpu_custom_call.1} parent=11 // pred_check
          %p240 = pneg %p68
        $region14: #{tpu_custom_call.1} parent=11 // pred_check_branch
          %242 = sbr.rel (%p240) target = $region16
        $region15: #{tpu_custom_call.1} parent=11 // pred_region
          %s244 = ssub.s32 256, 256
          %245 = vsyncadd [#allocation6], %s244
          %s246 = sshll.u32 [#allocation5], 4
          %s247 = int_to_ptr.vmem [resolvable:$true] %s246
          %252 = dma.hbm_to_vmem [thread:$0]  %s1, 256, %s247, [#allocation6], 64, 64, 4
        $region16: #{tpu_custom_call.1} parent=11 // pred_fallthru
          _
        // Predicated region
        $region17: #{tpu_custom_call.1} parent=11 // pred_check
          %p253 = pneg %p89
        $region18: #{tpu_custom_call.1} parent=11 // pred_check_branch
          %255 = sbr.rel (%p253) target = $region20
        $region19: #{tpu_custom_call.1} parent=11 // pred_region
          _
        $region20: #{tpu_custom_call.1} parent=11 // pred_fallthru
          _
        // Predicated region
        $region21: #{tpu_custom_call.1} parent=11 // pred_check
          %p256 = pneg %p110
        $region22: #{tpu_custom_call.1} parent=11 // pred_check_branch
          %258 = sbr.rel (%p256) target = $region24
        $region23: #{tpu_custom_call.1} parent=11 // pred_region
          _
        $region24: #{tpu_custom_call.1} parent=11 // pred_fallthru
          _
        // Predicated region
        $region25: #{tpu_custom_call.1} parent=11 // pred_check
          %p259 = pneg %p131
        $region26: #{tpu_custom_call.1} parent=11 // pred_check_branch
          %261 = sbr.rel (%p259) target = $region28
        $region27: #{tpu_custom_call.1} parent=11 // pred_region
          _
        $region28: #{tpu_custom_call.1} parent=11 // pred_fallthru
          _
        // Predicated region
        $region29: #{tpu_custom_call.1} parent=11 // pred_check
          %p262 = pneg %p152
        $region30: #{tpu_custom_call.1} parent=11 // pred_check_branch
          %264 = sbr.rel (%p262) target = $region32
        $region31: #{tpu_custom_call.1} parent=11 // pred_region
          %s266 = ssub.s32 512, 512
          %267 = vsyncadd [#allocation6], %s266
          %s268 = sshll.u32 [#allocation7], 4
          %s269 = int_to_ptr.vmem [resolvable:$true] %s268
          %274 = dma.hbm_to_vmem [thread:$0]  %s5, 512, %s269, [#allocation6], 128, 128, 8
        $region32: #{tpu_custom_call.1} parent=11 // pred_fallthru
          _
        // Predicated region
        $region33: #{tpu_custom_call.1} parent=11 // pred_check
          %p275 = pneg %p173
        $region34: #{tpu_custom_call.1} parent=11 // pred_check_branch
          %277 = sbr.rel (%p275) target = $region36
        $region35: #{tpu_custom_call.1} parent=11 // pred_region
          _
        $region36: #{tpu_custom_call.1} parent=11 // pred_fallthru
          _
      $region12: #{tpu_custom_call.1} parent=5 // pred_fallthru
        _
      %p278 = scmp.lt.s32.totalorder %s21, 2
      // Predicated region
      $region37: #{tpu_custom_call.1} parent=5 // pred_check
        %p279 = pneg %p278
      $region38: #{tpu_custom_call.1} parent=5 // pred_check_branch
        %281 = sbr.rel (%p279) target = $region40
      $region39: #{tpu_custom_call.1} parent=5 // pred_region
        // Predicated region
        $region41: #{tpu_custom_call.1} parent=39 // pred_check
          %p282 = pneg %p41
        $region42: #{tpu_custom_call.1} parent=39 // pred_check_branch
          %284 = sbr.rel (%p282) target = $region44
        $region43: #{tpu_custom_call.1} parent=39 // pred_region
          %s285 = sand.u32 %s31, 1
          %s286 = scalar_lea.sflag [#allocation3], %s285
          %s287 = sand.u32 %s31, 1
          %s288 = smul.addr %s287, 8
          %s289 = scalar_lea.vmem [#allocation2], %s288
          %s291 = ssub.s32 128, 128
          %292 = vsyncadd %s286, %s291
          %s293 = smul.addr %s21, 128
          %s294 = scalar_lea.hbm %s0, %s293
          %s296 = sshll.u32 %s289, 4
          %s297 = int_to_ptr.vmem [resolvable:$true] %s296
          %299 = dma.hbm_to_vmem [thread:$0]  %s294, 128, %s297, %s286
        $region44: #{tpu_custom_call.1} parent=39 // pred_fallthru
          _
        // Predicated region
        $region45: #{tpu_custom_call.1} parent=39 // pred_check
          %p300 = pneg %p193
        $region46: #{tpu_custom_call.1} parent=39 // pred_check_branch
          %302 = sbr.rel (%p300) target = $region48
        $region47: #{tpu_custom_call.1} parent=39 // pred_region
          %p303 = scmp.lt.s32.totalorder %s21, 1
          %s304 = scalar_select %p303, %s21, 1
          %s305 = smul.addr %s304, 8
          %s306 = scalar_lea.vmem %s7, %s305
        $region48: #{tpu_custom_call.1} parent=39 // pred_fallthru
          _
      $region40: #{tpu_custom_call.1} parent=5 // pred_fallthru
        _
      %p307 = scmp.le.s32.totalorder 1, %s21
      %p308 = scmp.lt.s32.totalorder %s21, 3
      %p309 = pnand %p307, %p308
      %p310 = pneg %p309
      // Predicated region
      $region49: #{tpu_custom_call.1} parent=5 // pred_check
        _
      $region50: #{tpu_custom_call.1} parent=5 // pred_check_branch
        %312 = sbr.rel (%p309) target = $region52
      $region51: #{tpu_custom_call.1} parent=5 // pred_region
        %s313 = ssub.s32 %s21, 1
        %s314 = sand.u32 %s34, 1
        %s315 = scalar_lea.sflag [#allocation3], %s314
        %s316 = sand.u32 %s34, 1
        %s317 = smul.addr %s316, 8
        %s318 = scalar_lea.vmem [#allocation2], %s317
        // Predicated region
        $region53: #{tpu_custom_call.1} parent=51 // pred_check
          %p319 = pneg %p47
        $region54: #{tpu_custom_call.1} parent=51 // pred_check_branch
          %321 = sbr.rel (%p319) target = $region56
        $region55: #{tpu_custom_call.1} parent=51 // pred_region
          %322 = dma.done %s315, 128
        $region56: #{tpu_custom_call.1} parent=51 // pred_fallthru
          _
        // Predicated region
        $region57: #{tpu_custom_call.1} parent=51 // pred_check
          %p323 = pneg %p68
        $region58: #{tpu_custom_call.1} parent=51 // pred_check_branch
          %325 = sbr.rel (%p323) target = $region60
        $region59: #{tpu_custom_call.1} parent=51 // pred_region
          %326 = dma.done [#allocation6], 256
        $region60: #{tpu_custom_call.1} parent=51 // pred_fallthru
          _
        // Predicated region
        $region61: #{tpu_custom_call.1} parent=51 // pred_check
          %p327 = pneg %p152
        $region62: #{tpu_custom_call.1} parent=51 // pred_check_branch
          %329 = sbr.rel (%p327) target = $region64
        $region63: #{tpu_custom_call.1} parent=51 // pred_region
          %330 = dma.done [#allocation6], 512
        $region64: #{tpu_custom_call.1} parent=51 // pred_fallthru
          _
        %s331 = sand.u32 %s34, 1
        %s332 = scalar_lea.sflag [#allocation3], %s331
        %s333 = sand.u32 %s34, 1
        %s334 = smul.addr %s333, 8
        %s335 = scalar_lea.vmem [#allocation2], %s334
        %p336 = pneg %p47
        %p337 = pneg %p44
        %p338 = pneg %p68
        %p339 = pneg %p65
        %p340 = pneg %p89
        %p341 = pneg %p86
        %p342 = pneg %p110
        %p343 = pneg %p107
        %p344 = pneg %p131
        %p345 = pneg %p128
        %p346 = pneg %p152
        %p347 = pneg %p149
        %p348 = pneg %p173
        %p349 = pneg %p170
        %p350 = scmp.lt.s32.totalorder %s26, 1
        %s351 = scalar_select %p350, %s26, 1
        %s352 = smul.addr %s351, 8
        %s353 = scalar_lea.vmem %s7, %s352
        %p354 = pneg %p199
        %p355 = pneg %p196
        %p356 = pneg %p225
        %p357 = pneg %p222
        %s358 = sand.u32 %s212, 1
        %s359 = scalar_lea.sflag [#allocation4], %s358
        %s360 = sand.u32 %s212, 1
        %s361 = smul.addr %s360, 8
        %s362 = scalar_lea.vmem [#allocation8], %s361
        %p363 = scmp.lt.s32.totalorder %s26, 1
        %s364 = scalar_select %p363, %s26, 1
        %s365 = smul.addr %s364, 8
        %s366 = scalar_lea.vmem %s7, %s365
        %v368 = vld [vmem:[%s318] sm:$0xff]
        %v369 = vpack.c.bf16 %v368, %v368
        %v370 = vld [vmem:[#allocation5] sm:$0xf]
        %v371 = vld [vmem:[#allocation5 + $0x4] sm:$0xf]
        %v372 = vld [vmem:[#allocation5 + $0x8] sm:$0xf]
        %v373 = vld [vmem:[#allocation5 + $0xc] sm:$0xf]
        %v374 = vld [vmem:[%s2] sm:$0x1]
        %v376 = vlaneseq
        %v377 = vshrl.u32 %v376, 7
        %v378 = vsub.s32 0, %v377
        %v379 = vrot.slane %v374, %v378
        %v385 = vunpack.c.l.b16 %v370
        %v386 = vunpack.c.l.b16 %v371
        %v387 = vunpack.c.l.b16 %v372
        %v388 = vunpack.c.l.b16 %v373
        %v389 = vpack.c.b16 %v386, %v385
        %v390 = vpack.c.b16 %v388, %v387
        %vm393 = vcmask 261120
        %v395 = vsel %vm393, %v369, 0
        %397 = vmatprep.subr.bf16.mxu0 0
        %398 = vmatpush1.bf16.msra.mxu0 %v389
        %399 = vmatprep.subr.bf16.mxu0 0
        %400 = vmatpush1.bf16.msra.mxu0 %v390
        %401 = vmatprep.subr.bf16.mxu0 0
        %402 = vmatpush1.bf16.msra.mxu0 0
        %403 = vmatprep.subr.bf16.mxu0 0
        %404 = vmatpush1.bf16.msra.mxu0 0
        %405 = vmatprep.subr.bf16.mxu0 0
        %406 = vmatpush1.bf16.msra.mxu0 0
        %407 = vmatprep.subr.bf16.mxu0 0
        %408 = vmatpush1.bf16.msra.mxu0 0
        %409 = vmatprep.subr.bf16.mxu0 0
        %410 = vmatpush1.bf16.msra.mxu0 0
        %411 = vmatprep.subr.bf16.mxu0 0
        %412 = vmatpush1.bf16.msra.mxu0 0
        %413 = vmatprep.subr.bf16.mxu0 0
        %414 = vmatpush1.bf16.msra.mxu0 0
        %415 = vmatprep.subr.bf16.mxu0 0
        %416 = vmatpush1.bf16.msra.mxu0 0
        %417 = vmatprep.subr.bf16.mxu0 0
        %418 = vmatpush1.bf16.msra.mxu0 0
        %419 = vmatprep.subr.bf16.mxu0 0
        %420 = vmatpush1.bf16.msra.mxu0 0
        %421 = vmatprep.subr.bf16.mxu0 0
        %422 = vmatpush1.bf16.msra.mxu0 0
        %423 = vmatprep.subr.bf16.mxu0 0
        %424 = vmatpush1.bf16.msra.mxu0 0
        %425 = vmatprep.subr.bf16.mxu0 0
        %426 = vmatpush1.bf16.msra.mxu0 0
        %427 = vmatprep.subr.bf16.mxu0 0
        %428 = vmatpush1.bf16.msra.mxu0 0
        %429 = vmatprep.mubr.bf16.mxu0 0
        %430 = vmatmul.mubr.bf16.gmra.mrb[0].mxu0 %v395
        %v431 = vpop.f32.mrb[0].mxu0
        %v432 = vadd.f32 %v379, %v431
        %v433 = vpop.f32.mrb[0].mxu0
        %v434 = vpop.f32.mrb[0].mxu0
        %v435 = vpop.f32.mrb[0].mxu0
        %436 = vdwg.mxu0
        %v437 = vmul.f32 %v432, 0.5
        %v438 = vmul.f32 %v432, 0.70710677
        %v439 = verf.f32.pop %v438
        %v440 = vadd.f32 %v439, 1.0
        %v441 = vmul.f32 %v437, %v440
        %v442 = vsel %vm393, %v441, 0.0
        %443 = vadd.xlane.f32.xlu0 %v442
        %v444 = vpop.xlane.xlu0 %443
        %v445 = vmul.f32 %v444, 0.03125
        %v446 = vsub.f32 %v441, %v445
        %v447 = vmul.f32 %v446, %v446
        %v448 = vsel %vm393, %v447, 0.0
        %449 = vadd.xlane.f32.xlu0 %v448
        %v450 = vpop.xlane.xlu0 %449
        %v451 = vmul.f32 %v450, 0.03125
        %v452 = vadd.f32 %v451, 1e-05
        %v453 = vrsqrt.pop %v452
        %v454 = vmul.f32 %v446, %v453
        %v455 = vld [vmem:[%s3] sm:$0x1]
        %v457 = vlaneseq
        %v458 = vshrl.u32 %v457, 7
        %v459 = vsub.s32 0, %v458
        %v460 = vrot.slane %v455, %v459
        %v462 = vmul.f32 %v454, %v460
        %v463 = vld [vmem:[%s4] sm:$0x1]
        %v465 = vlaneseq
        %v466 = vshrl.u32 %v465, 7
        %v467 = vsub.s32 0, %v466
        %v468 = vrot.slane %v463, %v467
        %v470 = vadd.f32 %v462, %v468
        %v471 = vpack.c.bf16 %v470, %v470
        %v472 = vld [vmem:[#allocation7] sm:$0xff]
        %v473 = vld [vmem:[#allocation7 + $0x8] sm:$0xff]
        %v474 = vld [vmem:[#allocation7 + $0x10] sm:$0xff]
        %v475 = vld [vmem:[#allocation7 + $0x18] sm:$0xff]
        %v476 = vld [vmem:[%s6] sm:$0x3]
        %v478 = vlaneseq
        %v479 = vshrl.u32 %v478, 7
        %v480 = vsub.s32 0, %v479
        %v481 = vrot.slane %v476, %v480
        %v482 = vlaneseq
        %v483 = vshrl.u32 %v482, 7
        %v484 = vsub.s32 1, %v483
        %v485 = vrot.slane %v476, %v484
        %v492 = vunpack.c.l.b16 %v472
        %v493 = vunpack.c.h.b16 %v472
        %v494 = vunpack.c.l.b16 %v473
        %v495 = vunpack.c.h.b16 %v473
        %v496 = vunpack.c.l.b16 %v474
        %v497 = vunpack.c.h.b16 %v474
        %v498 = vunpack.c.l.b16 %v475
        %v499 = vunpack.c.h.b16 %v475
        %v500 = vpack.c.b16 %v494, %v492
        %v501 = vpack.c.b16 %v495, %v493
        %v502 = vpack.c.b16 %v498, %v496
        %v503 = vpack.c.b16 %v499, %v497
        %v509 = vsel %vm393, %v471, 0
        %511 = vmatprep.subr.bf16.mxu0 %v501
        %512 = vmatpush1.bf16.msra.mxu0 %v500
        %513 = vmatprep.subr.bf16.mxu0 %v503
        %514 = vmatpush1.bf16.msra.mxu0 %v502
        %515 = vmatprep.subr.bf16.mxu0 0
        %516 = vmatpush1.bf16.msra.mxu0 0
        %517 = vmatprep.subr.bf16.mxu0 0
        %518 = vmatpush1.bf16.msra.mxu0 0
        %519 = vmatprep.subr.bf16.mxu0 0
        %520 = vmatpush1.bf16.msra.mxu0 0
        %521 = vmatprep.subr.bf16.mxu0 0
        %522 = vmatpush1.bf16.msra.mxu0 0
        %523 = vmatprep.subr.bf16.mxu0 0
        %524 = vmatpush1.bf16.msra.mxu0 0
        %525 = vmatprep.subr.bf16.mxu0 0
        %526 = vmatpush1.bf16.msra.mxu0 0
        %527 = vmatprep.subr.bf16.mxu0 0
        %528 = vmatpush1.bf16.msra.mxu0 0
        %529 = vmatprep.subr.bf16.mxu0 0
        %530 = vmatpush1.bf16.msra.mxu0 0
        %531 = vmatprep.subr.bf16.mxu0 0
        %532 = vmatpush1.bf16.msra.mxu0 0
        %533 = vmatprep.subr.bf16.mxu0 0
        %534 = vmatpush1.bf16.msra.mxu0 0
        %535 = vmatprep.subr.bf16.mxu0 0
        %536 = vmatpush1.bf16.msra.mxu0 0
        %537 = vmatprep.subr.bf16.mxu0 0
        %538 = vmatpush1.bf16.msra.mxu0 0
        %539 = vmatprep.subr.bf16.mxu0 0
        %540 = vmatpush1.bf16.msra.mxu0 0
        %541 = vmatprep.subr.bf16.mxu0 0
        %542 = vmatpush1.bf16.msra.mxu0 0
        %543 = vmatprep.mubr.bf16.mxu0 0
        %544 = vmatmul.mubr.bf16.gmra.mrb[0].mxu0 %v509
        %v545 = vpop.f32.mrb[0].mxu0
        %v546 = vadd.f32 %v481, %v545
        %v547 = vpop.f32.mrb[0].mxu0
        %v548 = vadd.f32 %v485, %v547
        %v549 = vpop.f32.mrb[0].mxu0
        %v550 = vpop.f32.mrb[0].mxu0
        %551 = vdwg.mxu0
        %v552 = vmul.f32 %v548, 0.5
        %v553 = vmul.f32 %v552, 1.442695
        %v554 = vpow.pop %v553
        %v555 = vld [vmem:[%s366] sm:$0xff]
        %v556 = vmul.f32 %v554, %v555
        %v557 = vadd.f32 %v546, %v556
        %558 = vst [vmem:[%s362] sm:$0xff] %v557
        %s559 = sand.u32 %s212, 1
        %s560 = scalar_lea.sflag [#allocation4], %s559
        %s561 = sand.u32 %s212, 1
        %s562 = smul.addr %s561, 8
        %s563 = scalar_lea.vmem [#allocation8], %s562
        // Predicated region
        $region65: #{tpu_custom_call.1} parent=51 // pred_check
          %p564 = pneg %p222
        $region66: #{tpu_custom_call.1} parent=51 // pred_check_branch
          %566 = sbr.rel (%p564) target = $region68
        $region67: #{tpu_custom_call.1} parent=51 // pred_region
          %s568 = ssub.s32 128, 128
          %569 = vsyncadd %s560, %s568
          %s570 = smul.addr %s26, 128
          %s571 = scalar_lea.hbm %s8, %s570
          %s573 = sshll.u32 %s563, 4
          %s574 = int_to_ptr.vmem [resolvable:$true] %s573
          %576 = dma.vmem_to_hbm [thread:$0]  %s574, 128, %s571, %s560
        $region68: #{tpu_custom_call.1} parent=51 // pred_fallthru
          _
      $region52: #{tpu_custom_call.1} parent=5 // pred_fallthru
        _
      %p577 = scmp.le.s32.totalorder 2, %s21
      // Predicated region
      $region69: #{tpu_custom_call.1} parent=5 // pred_check
        %p578 = pneg %p577
      $region70: #{tpu_custom_call.1} parent=5 // pred_check_branch
        %580 = sbr.rel (%p578) target = $region72
      $region71: #{tpu_custom_call.1} parent=5 // pred_region
        %s581 = ssub.s32 %s21, 2
        // Predicated region
        $region73: #{tpu_custom_call.1} parent=71 // pred_check
          %p582 = pneg %p228
        $region74: #{tpu_custom_call.1} parent=71 // pred_check_branch
          %584 = sbr.rel (%p582) target = $region76
        $region75: #{tpu_custom_call.1} parent=71 // pred_region
          %s585 = sand.u32 %s213, 1
          %s586 = scalar_lea.sflag [#allocation4], %s585
          %s587 = sand.u32 %s213, 1
          %s588 = smul.addr %s587, 8
          %s589 = scalar_lea.vmem [#allocation8], %s588
          %590 = dma.done %s586, 128
        $region76: #{tpu_custom_call.1} parent=71 // pred_fallthru
          _
      $region72: #{tpu_custom_call.1} parent=5 // pred_fallthru
        _
    $region6: #{tpu_custom_call.1} parent=1 // loop_footer
      %s25 = sadd.s32 1, %s21
    $region7: #{tpu_custom_call.1} parent=1 // loop_footer_branch
      %20 = sbr.rel target = $region3
    $region8: #{tpu_custom_call.1} parent=1 // loop_exit
      _
    %591 = vsyncpa [#allocation3], 1
    %s592 = scalar_lea.sflag [#allocation3], 1
    %593 = vsyncpa %s592, 1
    %594 = vsyncpa [#allocation6], 1
    %595 = vsyncpa [#allocation4], 1
    %s596 = scalar_lea.sflag [#allocation4], 1
    %597 = vsyncpa %s596, 1

// kernel: tpu_custom_call.1
$region0: #{tpu_custom_call.1}
  #allocation0 [shape = 'u32[]', space=smem, size = 0x4, offset = 0x4, fixed_abs, tag = 'smem constant byte address 0x4 - core index']
  #allocation1 [shape = 'u32[144,128]{1,0:T(1,128)}', space=vmem, size = 0x12000, scoped, tag = 'internal scratch']
  %s0 = inlined_call_operand.hbm [shape: f32[16,32], index: 0, kind: input, shape index: {}]
  %s1 = inlined_call_operand.hbm [shape: bf16[32,32], index: 1, kind: input, shape index: {}]
  %s2 = inlined_call_operand.vmem [shape: f32[1,32], index: 2, kind: input, shape index: {}]
  %s3 = inlined_call_operand.vmem [shape: f32[1,32], index: 3, kind: input, shape index: {}]
  %s4 = inlined_call_operand.vmem [shape: f32[1,32], index: 4, kind: input, shape index: {}]
  %s5 = inlined_call_operand.hbm [shape: bf16[32,256], index: 5, kind: input, shape index: {}]
  %s6 = inlined_call_operand.vmem [shape: f32[1,256], index: 6, kind: input, shape index: {}]
  %s7 = inlined_call_operand.vmem [shape: f32[16,128], index: 7, kind: input, shape index: {}]
  %s8 = inlined_call_operand.hbm [shape: f32[16,128], index: 8, kind: output, shape index: {}]
  %s9 = sld [smem:[#allocation0]]
  $region77: #{tpu_custom_call.1} parent=0
    _
  %s11 = ssub.s32 1, %s9
  %s12 = scalar_select 0, %s11, %s9
  $region1: #{tpu_custom_call.1} parent=0
    #allocation2 [shape = 'u8[8192]{0}', space=vmem, size = 0x2000, scoped, tag = 'input window, operand 0']
    #allocation3 [shape = 's32[2]{0}', space=sflag, size = 0x8, scoped, tag = 'scoped memory for tpu_custom_call.1']
    #allocation4 [shape = 's32[2]{0}', space=sflag, size = 0x8, scoped, tag = 'scoped memory for tpu_custom_call.1']
    #allocation5 [shape = 'u8[8192]{0}', space=vmem, size = 0x2000, scoped, tag = 'input window, operand 1, single buffered']
    #allocation6 [shape = 's32[1]{0}', space=sflag, size = 0x4, scoped, tag = 'scoped memory for tpu_custom_call.1']
    #allocation7 [shape = 'u8[16384]{0}', space=vmem, size = 0x4000, scoped, tag = 'input window, operand 5, single buffered']
    #allocation8 [shape = 'u8[8192]{0}', space=vmem, size = 0x2000, scoped, tag = 'output window, operand 0']
    %13 = vsyncpa [#allocation3], 0
    %s14 = scalar_lea.sflag [#allocation3], 1
    %15 = vsyncpa %s14, 0
    %16 = vsyncpa [#allocation6], 0
    %17 = vsyncpa [#allocation4], 0
    %s18 = scalar_lea.sflag [#allocation4], 1
    %19 = vsyncpa %s18, 0
    loop: start=0, step=1, limit=4
    $region2: #{tpu_custom_call.1} parent=1 // loop_pre_header
      _
    $region3: #{tpu_custom_call.1} parent=1 // loop_header
      %s21 = sphi 0, %s25
      %p22 = scmp.ge.s32.totalorder %s21, 4
      %s31 = sphi 0, %s33
      %s34 = sphi 0, %s31
      %s35 = sphi 0, %s34
      %s51 = sphi 0, %s35
      %s55 = sphi 0, %s55
      %s57 = sphi 0, %s55
      %s58 = sphi 0, %s57
      %s72 = sphi 0, %s58
      %s76 = sphi 0, %s76
      %s78 = sphi 0, %s76
      %s79 = sphi 0, %s78
      %s93 = sphi 0, %s79
      %s97 = sphi 0, %s97
      %s99 = sphi 0, %s97
      %s100 = sphi 0, %s99
      %s114 = sphi 0, %s100
      %s118 = sphi 0, %s118
      %s120 = sphi 0, %s118
      %s121 = sphi 0, %s120
      %s135 = sphi 0, %s121
      %s139 = sphi 0, %s139
      %s141 = sphi 0, %s139
      %s142 = sphi 0, %s141
      %s156 = sphi 0, %s142
      %s160 = sphi 0, %s160
      %s162 = sphi 0, %s160
      %s163 = sphi 0, %s162
      %s177 = sphi 0, %s163
      %s183 = sphi 0, %s185
      %s186 = sphi 0, %s183
      %s187 = sphi 0, %s186
      %s203 = sphi 0, %s187
      %s209 = sphi 0, %s211
      %s212 = sphi 0, %s209
      %s213 = sphi 0, %s212
      %s229 = sphi 0, %s213
    $region4: #{tpu_custom_call.1} parent=1 // loop_header_branch
      %24 = sbr.rel (%p22) target = $region8
    $region5: #{tpu_custom_call.1} parent=1 // loop_body
      %s26 = ssub.s32 %s21, 1
      %s27 = ssub.s32 %s21, 2
      %s28 = sadd.s32 %s21, 1
      %s29 = ssub.s32 %s21, %s28
      %p30 = scmp.eq.s32.totalorder %s29, 0
      %s32 = sadd.s32 %s31, 1
      %s33 = scalar_select %p30, %s31, %s32
      %p36 = pneg %p30
      %p37 = scmp.eq.s32.totalorder %s21, 1
      %p38 = por %p36, %p37
      %p39 = scmp.ne.s32.totalorder %s31, %s34
      %p40 = scmp.eq.s32.totalorder %s21, 0
      %p41 = por %p39, %p40
      %p42 = scmp.ne.s32.totalorder %s31, %s34
      %p43 = scmp.eq.s32.totalorder %s26, 1
      %p44 = por %p42, %p43
      %p45 = scmp.ne.s32.totalorder %s34, %s35
      %p46 = scmp.eq.s32.totalorder %s26, 0
      %p47 = por %p45, %p46
      %p48 = scmp.ne.s32.totalorder %s34, %s35
      %p49 = scmp.eq.s32.totalorder %s27, 1
      %p50 = por %p48, %p49
      %p52 = scmp.ne.s32.totalorder %s35, %s51
      %p53 = scmp.eq.s32.totalorder %s27, 0
      %p54 = por %p52, %p53
      %s56 = sadd.s32 %s55, 1
      %p59 = scmp.eq.s32.totalorder %s21, 1
      %p60 = scmp.ne.s32.totalorder %s55, %s57
      %p61 = scmp.eq.s32.totalorder %s21, 0
      %p62 = por %p60, %p61
      %p63 = scmp.ne.s32.totalorder %s55, %s57
      %p64 = scmp.eq.s32.totalorder %s26, 1
      %p65 = por %p63, %p64
      %p66 = scmp.ne.s32.totalorder %s57, %s58
      %p67 = scmp.eq.s32.totalorder %s26, 0
      %p68 = por %p66, %p67
      %p69 = scmp.ne.s32.totalorder %s57, %s58
      %p70 = scmp.eq.s32.totalorder %s27, 1
      %p71 = por %p69, %p70
      %p73 = scmp.ne.s32.totalorder %s58, %s72
      %p74 = scmp.eq.s32.totalorder %s27, 0
      %p75 = por %p73, %p74
      %s77 = sadd.s32 %s76, 1
      %p80 = scmp.eq.s32.totalorder %s21, 1
      %p81 = scmp.ne.s32.totalorder %s76, %s78
      %p82 = scmp.eq.s32.totalorder %s21, 0
      %p83 = por %p81, %p82
      %p84 = scmp.ne.s32.totalorder %s76, %s78
      %p85 = scmp.eq.s32.totalorder %s26, 1
      %p86 = por %p84, %p85
      %p87 = scmp.ne.s32.totalorder %s78, %s79
      %p88 = scmp.eq.s32.totalorder %s26, 0
      %p89 = por %p87, %p88
      %p90 = scmp.ne.s32.totalorder %s78, %s79
      %p91 = scmp.eq.s32.totalorder %s27, 1
      %p92 = por %p90, %p91
      %p94 = scmp.ne.s32.totalorder %s79, %s93
      %p95 = scmp.eq.s32.totalorder %s27, 0
      %p96 = por %p94, %p95
      %s98 = sadd.s32 %s97, 1
      %p101 = scmp.eq.s32.totalorder %s21, 1
      %p102 = scmp.ne.s32.totalorder %s97, %s99
      %p103 = scmp.eq.s32.totalorder %s21, 0
      %p104 = por %p102, %p103
      %p105 = scmp.ne.s32.totalorder %s97, %s99
      %p106 = scmp.eq.s32.totalorder %s26, 1
      %p107 = por %p105, %p106
      %p108 = scmp.ne.s32.totalorder %s99, %s100
      %p109 = scmp.eq.s32.totalorder %s26, 0
      %p110 = por %p108, %p109
      %p111 = scmp.ne.s32.totalorder %s99, %s100
      %p112 = scmp.eq.s32.totalorder %s27, 1
      %p113 = por %p111, %p112
      %p115 = scmp.ne.s32.totalorder %s100, %s114
      %p116 = scmp.eq.s32.totalorder %s27, 0
      %p117 = por %p115, %p116
      %s119 = sadd.s32 %s118, 1
      %p122 = scmp.eq.s32.totalorder %s21, 1
      %p123 = scmp.ne.s32.totalorder %s118, %s120
      %p124 = scmp.eq.s32.totalorder %s21, 0
      %p125 = por %p123, %p124
      %p126 = scmp.ne.s32.totalorder %s118, %s120
      %p127 = scmp.eq.s32.totalorder %s26, 1
      %p128 = por %p126, %p127
      %p129 = scmp.ne.s32.totalorder %s120, %s121
      %p130 = scmp.eq.s32.totalorder %s26, 0
      %p131 = por %p129, %p130
      %p132 = scmp.ne.s32.totalorder %s120, %s121
      %p133 = scmp.eq.s32.totalorder %s27, 1
      %p134 = por %p132, %p133
      %p136 = scmp.ne.s32.totalorder %s121, %s135
      %p137 = scmp.eq.s32.totalorder %s27, 0
      %p138 = por %p136, %p137
      %s140 = sadd.s32 %s139, 1
      %p143 = scmp.eq.s32.totalorder %s21, 1
      %p144 = scmp.ne.s32.totalorder %s139, %s141
      %p145 = scmp.eq.s32.totalorder %s21, 0
      %p146 = por %p144, %p145
      %p147 = scmp.ne.s32.totalorder %s139, %s141
      %p148 = scmp.eq.s32.totalorder %s26, 1
      %p149 = por %p147, %p148
      %p150 = scmp.ne.s32.totalorder %s141, %s142
      %p151 = scmp.eq.s32.totalorder %s26, 0
      %p152 = por %p150, %p151
      %p153 = scmp.ne.s32.totalorder %s141, %s142
      %p154 = scmp.eq.s32.totalorder %s27, 1
      %p155 = por %p153, %p154
      %p157 = scmp.ne.s32.totalorder %s142, %s156
      %p158 = scmp.eq.s32.totalorder %s27, 0
      %p159 = por %p157, %p158
      %s161 = sadd.s32 %s160, 1
      %p164 = scmp.eq.s32.totalorder %s21, 1
      %p165 = scmp.ne.s32.totalorder %s160, %s162
      %p166 = scmp.eq.s32.totalorder %s21, 0
      %p167 = por %p165, %p166
      %p168 = scmp.ne.s32.totalorder %s160, %s162
      %p169 = scmp.eq.s32.totalorder %s26, 1
      %p170 = por %p168, %p169
      %p171 = scmp.ne.s32.totalorder %s162, %s163
      %p172 = scmp.eq.s32.totalorder %s26, 0
      %p173 = por %p171, %p172
      %p174 = scmp.ne.s32.totalorder %s162, %s163
      %p175 = scmp.eq.s32.totalorder %s27, 1
      %p176 = por %p174, %p175
      %p178 = scmp.ne.s32.totalorder %s163, %s177
      %p179 = scmp.eq.s32.totalorder %s27, 0
      %p180 = por %p178, %p179
      %s181 = ssub.s32 %s21, %s28
      %p182 = scmp.eq.s32.totalorder %s181, 0
      %s184 = sadd.s32 %s183, 1
      %s185 = scalar_select %p182, %s183, %s184
      %p188 = pneg %p182
      %p189 = scmp.eq.s32.totalorder %s21, 1
      %p190 = por %p188, %p189
      %p191 = scmp.ne.s32.totalorder %s183, %s186
      %p192 = scmp.eq.s32.totalorder %s21, 0
      %p193 = por %p191, %p192
      %p194 = scmp.ne.s32.totalorder %s183, %s186
      %p195 = scmp.eq.s32.totalorder %s26, 1
      %p196 = por %p194, %p195
      %p197 = scmp.ne.s32.totalorder %s186, %s187
      %p198 = scmp.eq.s32.totalorder %s26, 0
      %p199 = por %p197, %p198
      %p200 = scmp.ne.s32.totalorder %s186, %s187
      %p201 = scmp.eq.s32.totalorder %s27, 1
      %p202 = por %p200, %p201
      %p204 = scmp.ne.s32.totalorder %s187, %s203
      %p205 = scmp.eq.s32.totalorder %s27, 0
      %p206 = por %p204, %p205
      %s207 = ssub.s32 %s21, %s28
      %p208 = scmp.eq.s32.totalorder %s207, 0
      %s210 = sadd.s32 %s209, 1
      %s211 = scalar_select %p208, %s209, %s210
      %p214 = pneg %p208
      %p215 = scmp.eq.s32.totalorder %s21, 1
      %p216 = por %p214, %p215
      %p217 = scmp.ne.s32.totalorder %s209, %s212
      %p218 = scmp.eq.s32.totalorder %s21, 0
      %p219 = por %p217, %p218
      %p220 = scmp.ne.s32.totalorder %s209, %s212
      %p221 = scmp.eq.s32.totalorder %s26, 1
      %p222 = por %p220, %p221
      %p223 = scmp.ne.s32.totalorder %s212, %s213
      %p224 = scmp.eq.s32.totalorder %s26, 0
      %p225 = por %p223, %p224
      %p226 = scmp.ne.s32.totalorder %s212, %s213
      %p227 = scmp.eq.s32.totalorder %s27, 1
      %p228 = por %p226, %p227
      %p230 = scmp.ne.s32.totalorder %s213, %s229
      %p231 = scmp.eq.s32.totalorder %s27, 0
      %p232 = por %p230, %p231
      %p233 = scmp.le.s32.totalorder 1, %s21
      %p234 = scmp.lt.s32.totalorder %s21, 3
      %p235 = pnand %p233, %p234
      %p236 = pneg %p235
      // Predicated region
      $region9: #{tpu_custom_call.1} parent=5 // pred_check
        _
      $region10: #{tpu_custom_call.1} parent=5 // pred_check_branch
        %238 = sbr.rel (%p235) target = $region12
      $region11: #{tpu_custom_call.1} parent=5 // pred_region
        %s239 = ssub.s32 %s21, 1
        // Predicated region
        $region13: #{tpu_custom_call.1} parent=11 // pred_check
          %p240 = pneg %p68
        $region14: #{tpu_custom_call.1} parent=11 // pred_check_branch
          %242 = sbr.rel (%p240) target = $region16
        $region15: #{tpu_custom_call.1} parent=11 // pred_region
          %s244 = ssub.s32 256, 256
          %245 = vsyncadd [#allocation6], %s244
          %s246 = sshll.u32 [#allocation5], 4
          %s247 = int_to_ptr.vmem [resolvable:$true] %s246
          %252 = dma.hbm_to_vmem [thread:$0]  %s1, 256, %s247, [#allocation6], 64, 64, 4
        $region16: #{tpu_custom_call.1} parent=11 // pred_fallthru
          _
        // Predicated region
        $region17: #{tpu_custom_call.1} parent=11 // pred_check
          %p253 = pneg %p89
        $region18: #{tpu_custom_call.1} parent=11 // pred_check_branch
          %255 = sbr.rel (%p253) target = $region20
        $region19: #{tpu_custom_call.1} parent=11 // pred_region
          _
        $region20: #{tpu_custom_call.1} parent=11 // pred_fallthru
          _
        // Predicated region
        $region21: #{tpu_custom_call.1} parent=11 // pred_check
          %p256 = pneg %p110
        $region22: #{tpu_custom_call.1} parent=11 // pred_check_branch
          %258 = sbr.rel (%p256) target = $region24
        $region23: #{tpu_custom_call.1} parent=11 // pred_region
          _
        $region24: #{tpu_custom_call.1} parent=11 // pred_fallthru
          _
        // Predicated region
        $region25: #{tpu_custom_call.1} parent=11 // pred_check
          %p259 = pneg %p131
        $region26: #{tpu_custom_call.1} parent=11 // pred_check_branch
          %261 = sbr.rel (%p259) target = $region28
        $region27: #{tpu_custom_call.1} parent=11 // pred_region
          _
        $region28: #{tpu_custom_call.1} parent=11 // pred_fallthru
          _
        // Predicated region
        $region29: #{tpu_custom_call.1} parent=11 // pred_check
          %p262 = pneg %p152
        $region30: #{tpu_custom_call.1} parent=11 // pred_check_branch
          %264 = sbr.rel (%p262) target = $region32
        $region31: #{tpu_custom_call.1} parent=11 // pred_region
          %s266 = ssub.s32 512, 512
          %267 = vsyncadd [#allocation6], %s266
          %s268 = sshll.u32 [#allocation7], 4
          %s269 = int_to_ptr.vmem [resolvable:$true] %s268
          %274 = dma.hbm_to_vmem [thread:$0]  %s5, 512, %s269, [#allocation6], 128, 128, 8
        $region32: #{tpu_custom_call.1} parent=11 // pred_fallthru
          _
        // Predicated region
        $region33: #{tpu_custom_call.1} parent=11 // pred_check
          %p275 = pneg %p173
        $region34: #{tpu_custom_call.1} parent=11 // pred_check_branch
          %277 = sbr.rel (%p275) target = $region36
        $region35: #{tpu_custom_call.1} parent=11 // pred_region
          _
        $region36: #{tpu_custom_call.1} parent=11 // pred_fallthru
          _
      $region12: #{tpu_custom_call.1} parent=5 // pred_fallthru
        _
      %p278 = scmp.lt.s32.totalorder %s21, 2
      // Predicated region
      $region37: #{tpu_custom_call.1} parent=5 // pred_check
        %p279 = pneg %p278
      $region38: #{tpu_custom_call.1} parent=5 // pred_check_branch
        %281 = sbr.rel (%p279) target = $region40
      $region39: #{tpu_custom_call.1} parent=5 // pred_region
        // Predicated region
        $region41: #{tpu_custom_call.1} parent=39 // pred_check
          %p282 = pneg %p41
        $region42: #{tpu_custom_call.1} parent=39 // pred_check_branch
          %284 = sbr.rel (%p282) target = $region44
        $region43: #{tpu_custom_call.1} parent=39 // pred_region
          %s285 = sand.u32 %s31, 1
          %s286 = scalar_lea.sflag [#allocation3], %s285
          %s287 = sand.u32 %s31, 1
          %s288 = smul.addr %s287, 8
          %s289 = scalar_lea.vmem [#allocation2], %s288
          %s291 = ssub.s32 128, 128
          %292 = vsyncadd %s286, %s291
          %s293 = smul.addr %s21, 128
          %s294 = scalar_lea.hbm %s0, %s293
          %s296 = sshll.u32 %s289, 4
          %s297 = int_to_ptr.vmem [resolvable:$true] %s296
          %299 = dma.hbm_to_vmem [thread:$0]  %s294, 128, %s297, %s286
        $region44: #{tpu_custom_call.1} parent=39 // pred_fallthru
          _
        // Predicated region
        $region45: #{tpu_custom_call.1} parent=39 // pred_check
          %p300 = pneg %p193
        $region46: #{tpu_custom_call.1} parent=39 // pred_check_branch
          %302 = sbr.rel (%p300) target = $region48
        $region47: #{tpu_custom_call.1} parent=39 // pred_region
          %p303 = scmp.lt.s32.totalorder %s21, 1
          %s304 = scalar_select %p303, %s21, 1
          %s305 = smul.addr %s304, 8
          %s306 = scalar_lea.vmem %s7, %s305
        $region48: #{tpu_custom_call.1} parent=39 // pred_fallthru
          _
      $region40: #{tpu_custom_call.1} parent=5 // pred_fallthru
        _
      %p307 = scmp.le.s32.totalorder 1, %s21
      %p308 = scmp.lt.s32.totalorder %s21, 3
      %p309 = pnand %p307, %p308
      %p310 = pneg %p309
      // Predicated region
      $region49: #{tpu_custom_call.1} parent=5 // pred_check
        _
      $region50: #{tpu_custom_call.1} parent=5 // pred_check_branch
        %312 = sbr.rel (%p309) target = $region52
      $region51: #{tpu_custom_call.1} parent=5 // pred_region
        %s313 = ssub.s32 %s21, 1
        %s314 = sand.u32 %s34, 1
        %s315 = scalar_lea.sflag [#allocation3], %s314
        %s316 = sand.u32 %s34, 1
        %s317 = smul.addr %s316, 8
        %s318 = scalar_lea.vmem [#allocation2], %s317
        // Predicated region
        $region53: #{tpu_custom_call.1} parent=51 // pred_check
          %p319 = pneg %p47
        $region54: #{tpu_custom_call.1} parent=51 // pred_check_branch
          %321 = sbr.rel (%p319) target = $region56
        $region55: #{tpu_custom_call.1} parent=51 // pred_region
          %322 = dma.done %s315, 128
        $region56: #{tpu_custom_call.1} parent=51 // pred_fallthru
          _
        // Predicated region
        $region57: #{tpu_custom_call.1} parent=51 // pred_check
          %p323 = pneg %p68
        $region58: #{tpu_custom_call.1} parent=51 // pred_check_branch
          %325 = sbr.rel (%p323) target = $region60
        $region59: #{tpu_custom_call.1} parent=51 // pred_region
          %326 = dma.done [#allocation6], 256
        $region60: #{tpu_custom_call.1} parent=51 // pred_fallthru
          _
        // Predicated region
        $region61: #{tpu_custom_call.1} parent=51 // pred_check
          %p327 = pneg %p152
        $region62: #{tpu_custom_call.1} parent=51 // pred_check_branch
          %329 = sbr.rel (%p327) target = $region64
        $region63: #{tpu_custom_call.1} parent=51 // pred_region
          %330 = dma.done [#allocation6], 512
        $region64: #{tpu_custom_call.1} parent=51 // pred_fallthru
          _
        %s331 = sand.u32 %s34, 1
        %s332 = scalar_lea.sflag [#allocation3], %s331
        %s333 = sand.u32 %s34, 1
        %s334 = smul.addr %s333, 8
        %s335 = scalar_lea.vmem [#allocation2], %s334
        %p336 = pneg %p47
        %p337 = pneg %p44
        %p338 = pneg %p68
        %p339 = pneg %p65
        %p340 = pneg %p89
        %p341 = pneg %p86
        %p342 = pneg %p110
        %p343 = pneg %p107
        %p344 = pneg %p131
        %p345 = pneg %p128
        %p346 = pneg %p152
        %p347 = pneg %p149
        %p348 = pneg %p173
        %p349 = pneg %p170
        %p350 = scmp.lt.s32.totalorder %s26, 1
        %s351 = scalar_select %p350, %s26, 1
        %s352 = smul.addr %s351, 8
        %s353 = scalar_lea.vmem %s7, %s352
        %p354 = pneg %p199
        %p355 = pneg %p196
        %p356 = pneg %p225
        %p357 = pneg %p222
        %s358 = sand.u32 %s212, 1
        %s359 = scalar_lea.sflag [#allocation4], %s358
        %s360 = sand.u32 %s212, 1
        %s361 = smul.addr %s360, 8
        %s362 = scalar_lea.vmem [#allocation8], %s361
        %p363 = scmp.lt.s32.totalorder %s26, 1
        %s364 = scalar_select %p363, %s26, 1
        %s365 = smul.addr %s364, 8
        %s366 = scalar_lea.vmem %s7, %s365
        %v368 = vld [vmem:[%s318] sm:$0xff]
        %v369 = vpack.c.bf16 %v368, %v368
        %v370 = vld [vmem:[#allocation5] sm:$0xf]
        %v371 = vld [vmem:[#allocation5 + $0x4] sm:$0xf]
        %v372 = vld [vmem:[#allocation5 + $0x8] sm:$0xf]
        %v373 = vld [vmem:[#allocation5 + $0xc] sm:$0xf]
        %v374 = vld [vmem:[%s2] sm:$0x1]
        %v376 = vlaneseq
        %v377 = vshrl.u32 %v376, 7
        %v378 = vsub.s32 0, %v377
        %v379 = vrot.slane %v374, %v378
        %v385 = vunpack.c.l.b16 %v370
        %v386 = vunpack.c.l.b16 %v371
        %v387 = vunpack.c.l.b16 %v372
        %v388 = vunpack.c.l.b16 %v373
        %v389 = vpack.c.b16 %v386, %v385
        %v390 = vpack.c.b16 %v388, %v387
        %vm393 = vcmask 261120
        %v395 = vsel %vm393, %v369, 0
        %397 = vmatprep.subr.bf16.mxu0 0
        %398 = vmatpush1.bf16.msra.mxu0 %v389
        %399 = vmatprep.subr.bf16.mxu0 0
        %400 = vmatpush1.bf16.msra.mxu0 %v390
        %401 = vmatprep.subr.bf16.mxu0 0
        %402 = vmatpush1.bf16.msra.mxu0 0
        %403 = vmatprep.subr.bf16.mxu0 0
        %404 = vmatpush1.bf16.msra.mxu0 0
        %405 = vmatprep.subr.bf16.mxu0 0
        %406 = vmatpush1.bf16.msra.mxu0 0
        %407 = vmatprep.subr.bf16.mxu0 0
        %408 = vmatpush1.bf16.msra.mxu0 0
        %409 = vmatprep.subr.bf16.mxu0 0
        %410 = vmatpush1.bf16.msra.mxu0 0
        %411 = vmatprep.subr.bf16.mxu0 0
        %412 = vmatpush1.bf16.msra.mxu0 0
        %413 = vmatprep.subr.bf16.mxu0 0
        %414 = vmatpush1.bf16.msra.mxu0 0
        %415 = vmatprep.subr.bf16.mxu0 0
        %416 = vmatpush1.bf16.msra.mxu0 0
        %417 = vmatprep.subr.bf16.mxu0 0
        %418 = vmatpush1.bf16.msra.mxu0 0
        %419 = vmatprep.subr.bf16.mxu0 0
        %420 = vmatpush1.bf16.msra.mxu0 0
        %421 = vmatprep.subr.bf16.mxu0 0
        %422 = vmatpush1.bf16.msra.mxu0 0
        %423 = vmatprep.subr.bf16.mxu0 0
        %424 = vmatpush1.bf16.msra.mxu0 0
        %425 = vmatprep.subr.bf16.mxu0 0
        %426 = vmatpush1.bf16.msra.mxu0 0
        %427 = vmatprep.subr.bf16.mxu0 0
        %428 = vmatpush1.bf16.msra.mxu0 0
        %429 = vmatprep.mubr.bf16.mxu0 0
        %430 = vmatmul.mubr.bf16.gmra.mrb[0].mxu0 %v395
        %v431 = vpop.f32.mrb[0].mxu0
        %v432 = vadd.f32 %v379, %v431
        %v433 = vpop.f32.mrb[0].mxu0
        %v434 = vpop.f32.mrb[0].mxu0
        %v435 = vpop.f32.mrb[0].mxu0
        %436 = vdwg.mxu0
        %v437 = vmul.f32 %v432, 0.5
        %v438 = vmul.f32 %v432, 0.70710677
        %v439 = verf.f32.pop %v438
        %v440 = vadd.f32 %v439, 1.0
        %v441 = vmul.f32 %v437, %v440
        %v442 = vsel %vm393, %v441, 0.0
        %443 = vadd.xlane.f32.xlu0 %v442
        %v444 = vpop.xlane.xlu0 %443
        %v445 = vmul.f32 %v444, 0.03125
        %v446 = vsub.f32 %v441, %v445
        %v447 = vmul.f32 %v446, %v446
        %v448 = vsel %vm393, %v447, 0.0
        %449 = vadd.xlane.f32.xlu0 %v448
        %v450 = vpop.xlane.xlu0 %449
        %v451 = vmul.f32 %v450, 0.03125
        %v452 = vadd.f32 %v451, 1e-05
        %v453 = vrsqrt.pop %v452
        %v454 = vmul.f32 %v446, %v453
        %v455 = vld [vmem:[%s3] sm:$0x1]
        %v457 = vlaneseq
        %v458 = vshrl.u32 %v457, 7
        %v459 = vsub.s32 0, %v458
        %v460 = vrot.slane %v455, %v459
        %v462 = vmul.f32 %v454, %v460
        %v463 = vld [vmem:[%s4] sm:$0x1]
        %v465 = vlaneseq
        %v466 = vshrl.u32 %v465, 7
        %v467 = vsub.s32 0, %v466
        %v468 = vrot.slane %v463, %v467
        %v470 = vadd.f32 %v462, %v468
        %v471 = vpack.c.bf16 %v470, %v470
        %v472 = vld [vmem:[#allocation7] sm:$0xff]
        %v473 = vld [vmem:[#allocation7 + $0x8] sm:$0xff]
        %v474 = vld [vmem:[#allocation7 + $0x10] sm:$0xff]
        %v475 = vld [vmem:[#allocation7 + $0x18] sm:$0xff]
        %v476 = vld [vmem:[%s6] sm:$0x3]
        %v478 = vlaneseq
        %v479 = vshrl.u32 %v478, 7
        %v480 = vsub.s32 0, %v479
        %v481 = vrot.slane %v476, %v480
        %v482 = vlaneseq
        %v483 = vshrl.u32 %v482, 7
        %v484 = vsub.s32 1, %v483
        %v485 = vrot.slane %v476, %v484
        %v492 = vunpack.c.l.b16 %v472
        %v493 = vunpack.c.h.b16 %v472
        %v494 = vunpack.c.l.b16 %v473
        %v495 = vunpack.c.h.b16 %v473
        %v496 = vunpack.c.l.b16 %v474
        %v497 = vunpack.c.h.b16 %v474
        %v498 = vunpack.c.l.b16 %v475
        %v499 = vunpack.c.h.b16 %v475
        %v500 = vpack.c.b16 %v494, %v492
        %v501 = vpack.c.b16 %v495, %v493
        %v502 = vpack.c.b16 %v498, %v496
        %v503 = vpack.c.b16 %v499, %v497
        %v509 = vsel %vm393, %v471, 0
        %511 = vmatprep.subr.bf16.mxu0 %v501
        %512 = vmatpush1.bf16.msra.mxu0 %v500
        %513 = vmatprep.subr.bf16.mxu0 %v503
        %514 = vmatpush1.bf16.msra.mxu0 %v502
        %515 = vmatprep.subr.bf16.mxu0 0
        %516 = vmatpush1.bf16.msra.mxu0 0
        %517 = vmatprep.subr.bf16.mxu0 0
        %518 = vmatpush1.bf16.msra.mxu0 0
        %519 = vmatprep.subr.bf16.mxu0 0
        %520 = vmatpush1.bf16.msra.mxu0 0
        %521 = vmatprep.subr.bf16.mxu0 0
        %522 = vmatpush1.bf16.msra.mxu0 0
        %523 = vmatprep.subr.bf16.mxu0 0
        %524 = vmatpush1.bf16.msra.mxu0 0
        %525 = vmatprep.subr.bf16.mxu0 0
        %526 = vmatpush1.bf16.msra.mxu0 0
        %527 = vmatprep.subr.bf16.mxu0 0
        %528 = vmatpush1.bf16.msra.mxu0 0
        %529 = vmatprep.subr.bf16.mxu0 0
        %530 = vmatpush1.bf16.msra.mxu0 0
        %531 = vmatprep.subr.bf16.mxu0 0
        %532 = vmatpush1.bf16.msra.mxu0 0
        %533 = vmatprep.subr.bf16.mxu0 0
        %534 = vmatpush1.bf16.msra.mxu0 0
        %535 = vmatprep.subr.bf16.mxu0 0
        %536 = vmatpush1.bf16.msra.mxu0 0
        %537 = vmatprep.subr.bf16.mxu0 0
        %538 = vmatpush1.bf16.msra.mxu0 0
        %539 = vmatprep.subr.bf16.mxu0 0
        %540 = vmatpush1.bf16.msra.mxu0 0
        %541 = vmatprep.subr.bf16.mxu0 0
        %542 = vmatpush1.bf16.msra.mxu0 0
        %543 = vmatprep.mubr.bf16.mxu0 0
        %544 = vmatmul.mubr.bf16.gmra.mrb[0].mxu0 %v509
        %v545 = vpop.f32.mrb[0].mxu0
        %v546 = vadd.f32 %v481, %v545
        %v547 = vpop.f32.mrb[0].mxu0
        %v548 = vadd.f32 %v485, %v547
        %v549 = vpop.f32.mrb[0].mxu0
        %v550 = vpop.f32.mrb[0].mxu0
        %551 = vdwg.mxu0
        %v552 = vmul.f32 %v548, 0.5
        %v553 = vmul.f32 %v552, 1.442695
        %v554 = vpow.pop %v553
        %v555 = vld [vmem:[%s366] sm:$0xff]
        %v556 = vmul.f32 %v554, %v555
        %v557 = vadd.f32 %v546, %v556
        %558 = vst [vmem:[%s362] sm:$0xff] %v557
        %s559 = sand.u32 %s212, 1
        %s560 = scalar_lea.sflag [#allocation4], %s559
        %s561 = sand.u32 %s212, 1
        %s562 = smul.addr %s561, 8
        %s563 = scalar_lea.vmem [#allocation8], %s562
        // Predicated region
        $region65: #{tpu_custom_call.1} parent=51 // pred_check
          %p564 = pneg %p222
        $region66: #{tpu_custom_call.1} parent=51 // pred_check_branch
          %566 = sbr.rel (%p564) target = $region68
        $region67: #{tpu_custom_call.1} parent=51 // pred_region
          %s568 = ssub.s32 128, 128
          %569 = vsyncadd %s560, %s568
          %s570 = smul.addr %s26, 128
          %s571 = scalar_lea.hbm %s8, %s570
          %s573 = sshll.u32 %s563, 4
          %s574 = int_to_ptr.vmem [resolvable:$true] %s573
          %576 = dma.vmem_to_hbm [thread:$0]  %s574, 128, %s571, %s560
        $region68: #{tpu_custom_call.1} parent=51 // pred_fallthru
          _
      $region52: #{tpu_custom_call.1} parent=5 // pred_fallthru
        _
      %p577 = scmp.le.s32.totalorder 2, %s21
      // Predicated region
      $region69: #{tpu_custom_call.1} parent=5 // pred_check
        %p578 = pneg %p577
      $region70: #{tpu_custom_call.1} parent=5 // pred_check_branch
        %580 = sbr.rel (%p578) target = $region72
      $region71: #{tpu_custom_call.1} parent=5 // pred_region
        %s581 = ssub.s32 %s21, 2
        // Predicated region
        $region73: #{tpu_custom_call.1} parent=71 // pred_check
          %p582 = pneg %p228
        $region74: #{tpu_custom_call.1} parent=71 // pred_check_branch
          %584 = sbr.rel (%p582) target = $region76
        $region75: #{tpu_custom_call.1} parent=71 // pred_region
          %s585 = sand.u32 %s213, 1
          %s586 = scalar_lea.sflag [#allocation4], %s585
          %s587 = sand.u32 %s213, 1
          %s588 = smul.addr %s587, 8
          %s589 = scalar_lea.vmem [#allocation8], %s588
          %590 = dma.done %s586, 128
        $region76: #{tpu_custom_call.1} parent=71 // pred_fallthru
          _
      $region72: #{tpu_custom_call.1} parent=5 // pred_fallthru
        _
    $region6: #{tpu_custom_call.1} parent=1 // loop_footer
      %s25 = sadd.s32 1, %s21
    $region7: #{tpu_custom_call.1} parent=1 // loop_footer_branch
      %20 = sbr.rel target = $region3
    $region8: #{tpu_custom_call.1} parent=1 // loop_exit
      _
    %591 = vsyncpa [#allocation3], 1
    %s592 = scalar_lea.sflag [#allocation3], 1
    %593 = vsyncpa %s592, 1
    %594 = vsyncpa [#allocation6], 1
    %595 = vsyncpa [#allocation4], 1
    %s596 = scalar_lea.sflag [#allocation4], 1
    %597 = vsyncpa %s596, 1

</llo_original>
